<compile_context>
chip_gen: v5e
topology: v5e:2x2
jax: 0.10.0
libtpu: 0.0.40
codegen_flags: <defaults>
</compile_context>

<pallas_src>
import functools
import math

import jax
import jax.numpy as jnp
from jax.experimental import pallas as pl
from jax.experimental.pallas import tpu as pltpu

# ---------------------------------------------------------------------------
# Tunables
# ---------------------------------------------------------------------------

NODE_TILE = 256                     # rows per grid step for node-indexed tensors
EDGE_TILE = 512                     # edges per tile / reduction step
VMEM_LIMIT = 32 * 1024 * 1024       # explicit scoped-VMEM budget (safe v5e/v6e/v7x)
_LN_EPS = 1e-5
_BN_EPS = 1e-5


def _round_up(x, m):
    return ((x + m - 1) // m) * m


def _pick_tile(n, desired, align):
    """Tile size (multiple of `align`) and padded extent for an axis of length n."""
    t = min(_round_up(n, align), _round_up(desired, align))
    return t, _round_up(n, t)


def _pad_rows(a, n_pad, value=0):
    n = a.shape[0]
    if n_pad == n:
        return a
    pad = [(0, n_pad - n)] + [(0, 0)] * (a.ndim - 1)
    return jnp.pad(a, pad, constant_values=value)


# ---------------------------------------------------------------------------
# Pallas kernels
# ---------------------------------------------------------------------------

def linear_act(x, w, b, *, relu=False, tile_rows=NODE_TILE):
    """y = (x @ w + b), optional fused ReLU; row-tiled, bf16 MXU / f32 accumulate."""
    M, K = x.shape
    N = w.shape[1]
    tm, M_pad = _pick_tile(M, tile_rows, 16)
    x_pad = _pad_rows(x, M_pad)

    def kernel(x_ref, w_ref, b_ref, o_ref):
        y = jnp.dot(x_ref[...].astype(jnp.bfloat16),
                    w_ref[...].astype(jnp.bfloat16),
                    preferred_element_type=jnp.float32) + b_ref[...]
        if relu:
            y = jnp.maximum(y, 0.0)
        o_ref[...] = y

    cost = pl.CostEstimate(
        flops=2 * M_pad * K * N, transcendentals=0,
        bytes_accessed=M_pad * K * 4 + K * N * 4 + M_pad * N * 4)

    out = pl.pallas_call(
        kernel,
        out_shape=jax.ShapeDtypeStruct((M_pad, N), jnp.float32),
        grid_spec=pltpu.PrefetchScalarGridSpec(
            num_scalar_prefetch=0,
            grid=(M_pad // tm,),
            in_specs=[pl.BlockSpec((tm, K), lambda i: (i, 0)),
                      pl.BlockSpec((K, N), lambda i: (0, 0)),
                      pl.BlockSpec((1, N), lambda i: (0, 0))],
            out_specs=pl.BlockSpec((tm, N), lambda i: (i, 0))),
        compiler_params=pltpu.CompilerParams(
            dimension_semantics=("parallel",),
            vmem_limit_bytes=VMEM_LIMIT),
        cost_estimate=cost,
    )(x_pad, w, b.reshape(1, N))
    return out[:M]


def dan_node_transform(x, wi, bi, wp, bp, g, beta, *, tile_rows=NODE_TILE):
    """Fused node path of one DAN layer:

        xw = x @ W_input + b_input
        h  = LayerNorm(relu(xw @ W_proj_gcn + b_proj_gcn))

    Both matmuls and the LayerNorm epilogue live in ONE row-tiled kernel, so the
    intermediate xw never makes an extra HBM roundtrip before proj_gcn.
    """
    M, K = x.shape
    H = wi.shape[1]
    tm, M_pad = _pick_tile(M, tile_rows, 16)
    x_pad = _pad_rows(x, M_pad)

    def kernel(x_ref, wi_ref, bi_ref, wp_ref, bp_ref, g_ref, bt_ref,
               xw_ref, h_ref):
        xw = jnp.dot(x_ref[...].astype(jnp.bfloat16),
                     wi_ref[...].astype(jnp.bfloat16),
                     preferred_element_type=jnp.float32) + bi_ref[...]
        xw_ref[...] = xw
        y = jnp.dot(xw.astype(jnp.bfloat16),
                    wp_ref[...].astype(jnp.bfloat16),
                    preferred_element_type=jnp.float32) + bp_ref[...]
        y = jnp.maximum(y, 0.0)
        mu = jnp.mean(y, axis=-1, keepdims=True)
        var = jnp.mean(jnp.square(y - mu), axis=-1, keepdims=True)
        h_ref[...] = (y - mu) * jax.lax.rsqrt(var + _LN_EPS) * g_ref[...] + bt_ref[...]

    cost = pl.CostEstimate(
        flops=2 * M_pad * K * H + 2 * M_pad * H * H,
        transcendentals=M_pad,
        bytes_accessed=M_pad * K * 4 + (K * H + H * H + 4 * H) * 4
                       + 2 * M_pad * H * 4)

    xw, h = pl.pallas_call(
        kernel,
        out_shape=(jax.ShapeDtypeStruct((M_pad, H), jnp.float32),
                   jax.ShapeDtypeStruct((M_pad, H), jnp.float32)),
        grid_spec=pltpu.PrefetchScalarGridSpec(
            num_scalar_prefetch=0,
            grid=(M_pad // tm,),
            in_specs=[pl.BlockSpec((tm, K), lambda i: (i, 0)),
                      pl.BlockSpec((K, H), lambda i: (0, 0)),
                      pl.BlockSpec((1, H), lambda i: (0, 0)),
                      pl.BlockSpec((H, H), lambda i: (0, 0)),
                      pl.BlockSpec((1, H), lambda i: (0, 0)),
                      pl.BlockSpec((1, H), lambda i: (0, 0)),
                      pl.BlockSpec((1, H), lambda i: (0, 0))],
            out_specs=(pl.BlockSpec((tm, H), lambda i: (i, 0)),
                       pl.BlockSpec((tm, H), lambda i: (i, 0)))),
        compiler_params=pltpu.CompilerParams(
            dimension_semantics=("parallel",),
            vmem_limit_bytes=VMEM_LIMIT),
        cost_estimate=cost,
    )(x_pad, wi, bi.reshape(1, H), wp, bp.reshape(1, H),
      g.reshape(1, H), beta.reshape(1, H))
    return xw[:M], h[:M]


def relation_transform(x_j, edge_type, w_rel, *, tile_rows=EDGE_TILE):
    """res[e] = x_j[e] @ W_rel[edge_type[e]]  as R masked MXU matmuls per edge tile.

    Avoids materializing the (E, R*H) masked slab in HBM: only x_j, the int32
    edge types and the stacked relation weights are read.
    """
    E, H = x_j.shape
    R = w_rel.shape[0]
    te, E_pad = _pick_tile(E, tile_rows, 128)
    x_pad = _pad_rows(x_j, E_pad)
    et_pad = _pad_rows(edge_type.reshape(E, 1).astype(jnp.int32), E_pad, value=-1)
    w_flat = w_rel.reshape(R * H, H)

    def kernel(x_ref, et_ref, w_ref, o_ref):
        xb = x_ref[...].astype(jnp.bfloat16)
        et = et_ref[...]                                 # (te, 1) int32
        res = jnp.zeros((te, H), jnp.float32)
        for r in range(R):                               # R is small & static
            y = jnp.dot(xb, w_ref[pl.ds(r * H, H), :].astype(jnp.bfloat16),
                        preferred_element_type=jnp.float32)
            res = res + y * (et == r).astype(jnp.float32)
        o_ref[...] = res

    cost = pl.CostEstimate(
        flops=2 * E_pad * H * H * R, transcendentals=0,
        bytes_accessed=E_pad * H * 4 + E_pad * 4 + R * H * H * 4 + E_pad * H * 4)

    out = pl.pallas_call(
        kernel,
        out_shape=jax.ShapeDtypeStruct((E_pad, H), jnp.float32),
        grid_spec=pltpu.PrefetchScalarGridSpec(
            num_scalar_prefetch=0,
            grid=(E_pad // te,),
            in_specs=[pl.BlockSpec((te, H), lambda i: (i, 0)),
                      pl.BlockSpec((te, 1), lambda i: (i, 0)),
                      pl.BlockSpec((R * H, H), lambda i: (0, 0))],
            out_specs=pl.BlockSpec((te, H), lambda i: (i, 0))),
        compiler_params=pltpu.CompilerParams(
            dimension_semantics=("parallel",),
            vmem_limit_bytes=VMEM_LIMIT),
        cost_estimate=cost,
    )(x_pad, et_pad, w_flat)
    return out[:E]


def aggregate_combine(h, row, payload, w_out, b_out, ln_g, ln_b, *, num_nodes):
    """Fused DAN tail for one layer:

        acc     = scatter-add over destination of [x_j*norm | p*res | p]
                  computed as (one-hot destination tile) @ payload on the MXU,
                  with the one-hot built IN-REGISTER from the int32 row index
                  (no dense N x E matrix ever touches HBM)
        msg_gcn = h + acc[:, :H]
        msg     = acc[:, H:2H] / acc[:, 2H:]       (segment-softmax weighted sum)
        out     = LayerNorm((msg_gcn + 0.1*relu(msg)) @ W_out + b_out)

    Grid: (node tiles [parallel], edge tiles [arbitrary reduction]); the edge
    axis accumulates into a VMEM scratch, init/finalized with pl.when.
    """
    E, threeH = payload.shape
    H = threeH // 3
    O = w_out.shape[1]

    tn, N_pad = _pick_tile(num_nodes, NODE_TILE, 16)
    te, E_pad = _pick_tile(E, EDGE_TILE, 128)

    h_pad = _pad_rows(h, N_pad)
    pay_pad = _pad_rows(payload.astype(jnp.bfloat16), E_pad)
    row_pad = _pad_rows(row.astype(jnp.int32), E_pad, value=-1).reshape(1, E_pad)

    def kernel(h_ref, row_ref, pay_ref, w_ref, b_ref, g_ref, bt_ref,
               o_ref, acc_ref):
        i = pl.program_id(0)
        e = pl.program_id(1)

        @pl.when(e == 0)
        def _():
            acc_ref[...] = jnp.zeros_like(acc_ref)

        # Destination one-hot for this (node-tile, edge-tile), built in-register:
        #   onehot[n, k] = 1  iff  row[e*te + k] == i*tn + n
        # Padded edges carry row == -1 and zero payload, so they contribute 0.
        node_ids = i * tn + jax.lax.broadcasted_iota(jnp.int32, (tn, te), 0)
        onehot = (node_ids == row_ref[...]).astype(jnp.bfloat16)
        acc_ref[...] += jnp.dot(onehot, pay_ref[...],
                                preferred_element_type=jnp.float32)

        @pl.when(e == pl.num_programs(1) - 1)
        def _():
            acc = acc_ref[...]
            msg_gcn = h_ref[...] + acc[:, :H]
            num = acc[:, H:2 * H]
            den = acc[:, 2 * H:]
            # den is exactly 0 for empty segments and >= 1 otherwise (per-segment
            # max subtraction puts the max edge at exp(0) == 1).
            inv = pl.reciprocal(jnp.maximum(den, 1.0), approx=True)
            msg = jnp.where(den > 0.0, num * inv, 0.0)
            z = msg_gcn + 0.1 * jnp.maximum(msg, 0.0)
            y = jnp.dot(z.astype(jnp.bfloat16), w_ref[...].astype(jnp.bfloat16),
                        preferred_element_type=jnp.float32) + b_ref[...]
            mu = jnp.mean(y, axis=-1, keepdims=True)
            var = jnp.mean(jnp.square(y - mu), axis=-1, keepdims=True)
            o_ref[...] = ((y - mu) * jax.lax.rsqrt(var + _LN_EPS)
                          * g_ref[...] + bt_ref[...])

    cost = pl.CostEstimate(
        flops=2 * N_pad * E_pad * 3 * H + 2 * N_pad * H * O,
        transcendentals=0,
        bytes_accessed=(N_pad * H * 4
                        + (N_pad // tn) * E_pad * (4 + 3 * H * 2)
                        + H * O * 4 + N_pad * O * 4))

    out = pl.pallas_call(
        kernel,
        out_shape=jax.ShapeDtypeStruct((N_pad, O), jnp.float32),
        grid_spec=pltpu.PrefetchScalarGridSpec(
            num_scalar_prefetch=0,
            grid=(N_pad // tn, E_pad // te),
            in_specs=[
                pl.BlockSpec((tn, H), lambda i, e: (i, 0)),        # h
                pl.BlockSpec((1, te), lambda i, e: (0, e)),        # row indices
                pl.BlockSpec((te, 3 * H), lambda i, e: (e, 0)),    # edge payload
                pl.BlockSpec((H, O), lambda i, e: (0, 0)),         # W_out
                pl.BlockSpec((1, O), lambda i, e: (0, 0)),         # b_out
                pl.BlockSpec((1, O), lambda i, e: (0, 0)),         # LN gamma
                pl.BlockSpec((1, O), lambda i, e: (0, 0)),         # LN beta
            ],
            out_specs=pl.BlockSpec((tn, O), lambda i, e: (i, 0)),
            scratch_shapes=[pltpu.VMEM((tn, 3 * H), jnp.float32)]),
        compiler_params=pltpu.CompilerParams(
            dimension_semantics=("parallel", "arbitrary"),
            vmem_limit_bytes=VMEM_LIMIT),
        cost_estimate=cost,
    )(h_pad, row_pad, pay_pad, w_out,
      b_out.reshape(1, O), ln_g.reshape(1, O), ln_b.reshape(1, O))
    return out[:num_nodes]


# ---------------------------------------------------------------------------
# Parameter init (deterministic, shapes match the PyTorch __init__)
# ---------------------------------------------------------------------------

def init_linear_params(key, fan_in, fan_out):
    kw, kb = jax.random.split(key)
    bound = 1.0 / math.sqrt(fan_in)
    w = jax.random.uniform(kw, (fan_in, fan_out), jnp.float32, -bound, bound)
    b = jax.random.uniform(kb, (fan_out,), jnp.float32, -bound, bound)
    return w, b


def init_dan_params(key, dim_in, dim_out, rel_num):
    keys = jax.random.split(key, 4)
    bound = 1.0 / math.sqrt(dim_in)   # kaiming_uniform(a=sqrt(5)) bound
    w_rel = jax.random.uniform(keys[0], (rel_num, dim_in, dim_in),
                               jnp.float32, -bound, bound)
    proj_gcn_w, proj_gcn_b = init_linear_params(keys[1], dim_in, dim_in)
    w_input_w, w_input_b = init_linear_params(keys[2], dim_in, dim_in)
    out_w, out_b = init_linear_params(keys[3], dim_in, dim_out)
    return dict(
        w_rel=w_rel,
        proj_gcn_w=proj_gcn_w, proj_gcn_b=proj_gcn_b,
        norm_gcn_g=jnp.ones(dim_in, jnp.float32),
        norm_gcn_b=jnp.zeros(dim_in, jnp.float32),
        w_input_w=w_input_w, w_input_b=w_input_b,
        out_w=out_w, out_b=out_b,
        norm_g=jnp.ones(dim_out, jnp.float32),
        norm_b=jnp.zeros(dim_out, jnp.float32))


def init_params(key, input_dim, hidden_dim, output_dim, rel_num, n_layer):
    keys = jax.random.split(key, n_layer + 1)
    proj_w, proj_b = init_linear_params(keys[0], input_dim, hidden_dim)
    dan_layers = []
    for i in range(n_layer):
        din = hidden_dim if i == 0 else output_dim
        dan_layers.append(init_dan_params(keys[i + 1], din, output_dim, rel_num))
    return dict(
        proj_w=proj_w, proj_b=proj_b,
        bn_g=jnp.ones(hidden_dim, jnp.float32),
        bn_b=jnp.zeros(hidden_dim, jnp.float32),
        bn_mean=jnp.zeros(hidden_dim, jnp.float32),
        bn_var=jnp.ones(hidden_dim, jnp.float32),
        dan_layers=dan_layers)


# ---------------------------------------------------------------------------
# Forward pass (glue around the Pallas kernels)
# ---------------------------------------------------------------------------

def dan_forward(p, x, row, col, edge_type, norm_weight, num_nodes):
    # W_input + norm_gcn(relu(proj_gcn(.))) fused in one node-tiled kernel.
    xw, h = dan_node_transform(x, p['w_input_w'], p['w_input_b'],
                               p['proj_gcn_w'], p['proj_gcn_b'],
                               p['norm_gcn_g'], p['norm_gcn_b'])

    # XLA glue: gather source-node features per edge.
    # TODO(synk): a sorted-by-destination segment layout (scalar prefetch) would
    # let the gather and the scatter both live inside the Pallas kernels.
    x_j = xw[col]                                                  # (E, H)

    # Per-edge relation transform (MXU).
    res = relation_transform(x_j, edge_type, p['w_rel'])           # (E, H)

    # Segment softmax over destination node with the true per-segment max
    # (scatter-max / gather / exp are XLA glue and fuse into one pass).
    seg_max = jnp.full((num_nodes, res.shape[1]), -jnp.inf,
                       jnp.float32).at[row].max(res)
    p_soft = jnp.exp(res - seg_max[row])

    payload = jnp.concatenate([x_j * norm_weight, p_soft * res, p_soft],
                              axis=1).astype(jnp.bfloat16)         # (E, 3H)
    return aggregate_combine(h, row, payload, p['out_w'], p['out_b'],
                             p['norm_g'], p['norm_b'], num_nodes=num_nodes)


@functools.partial(jax.jit, static_argnums=(6,))
def gnn_conv_forward(params, x, edge_index, idx, edge_type, edge_weight, num_nodes):
    if edge_weight is not None:
        # TODO(synk): the edge_weight branch of DAN reads self.norm_weight which is
        # never initialized in the reference module (would crash in PyTorch); only
        # the edge_weight=None path is implemented.
        raise NotImplementedError
    row = edge_index[0]
    col = edge_index[1]

    # gcn_norm(edge_index, add_self_loops=False): deg over col, symmetric norm.
    deg = jnp.zeros((num_nodes,), jnp.float32).at[col].add(1.0)
    dinv = jnp.where(deg > 0, jax.lax.rsqrt(jnp.maximum(deg, 1.0)), 0.0)
    norm_weight = (dinv[row] * dinv[col]).reshape(-1, 1)

    # proj -> BatchNorm1d (eval, folded into the linear weights) -> ReLU, fused.
    scale = params['bn_g'] * jax.lax.rsqrt(params['bn_var'] + _BN_EPS)
    shift = params['bn_b'] - params['bn_mean'] * scale
    w_proj = params['proj_w'] * scale[None, :]
    b_proj = params['proj_b'] * scale + shift
    contagion = linear_act(x, w_proj, b_proj, relu=True)

    for p in params['dan_layers']:
        contagion = dan_forward(p, contagion, row, col, edge_type,
                                norm_weight, num_nodes)

    # Inference: Dropout(0.5) is identity; exact erf-GELU applied to the gathered
    # rows only (elementwise, so gather-then-GELU == GELU-then-gather).
    return jax.nn.gelu(contagion[idx], approximate=False)


# ---------------------------------------------------------------------------

if __name__ == "__main__":
    key = jax.random.PRNGKey(0)
    num_nodes, num_edges = 64, 128
    input_dim, hidden_dim, output_dim = 16, 32, 32
    rel_num, n_layer = 3, 2

    k = jax.random.split(key, 6)
    x = jax.random.normal(k[0], (num_nodes, input_dim), jnp.float32)
    row = jax.random.randint(k[1], (num_edges,), 0, num_nodes, jnp.int32)
    col = jax.random.randint(k[2], (num_edges,), 0, num_nodes, jnp.int32)
    edge_index = jnp.stack([row, col])
    edge_type = jax.random.randint(k[3], (num_edges,), 0, rel_num, jnp.int32)
    idx = jnp.arange(16, dtype=jnp.int32)

    params = init_params(k[4], input_dim, hidden_dim, output_dim, rel_num, n_layer)

    out = gnn_conv_forward(params, x, edge_index, idx, edge_type, None, num_nodes)
    out = jax.block_until_ready(out)
    assert out.shape == (idx.shape[0], output_dim)
    assert bool(jnp.all(jnp.isfinite(out)))
    print("KERNEL_OK")
</pallas_src>

<mosaic_0001>
module attributes {stable_mosaic.version = 11 : i64} {
  func.func @kernel(%arg0: i32, %arg1: memref<64x16xf32, #tpu.memory_space<vmem>>, %arg2: memref<16x32xf32, #tpu.memory_space<vmem>>, %arg3: memref<1x32xf32, #tpu.memory_space<vmem>>, %arg4: memref<64x32xf32, #tpu.memory_space<vmem>>) attributes {dimension_semantics = [#tpu.dimension_semantics<parallel>], iteration_bounds = array<i64: 1>, scalar_prefetch = 0 : i64, scratch_operands = 0 : i64, tpu.core_type = #tpu.core_type<tc>, window_params = [{transform_indices = @transform_0, window_bounds = array<i64: 64, 16>}, {pipeline_mode = #tpu.pipeline_mode<synchronous>, transform_indices = @transform_1, window_bounds = array<i64: 16, 32>}, {pipeline_mode = #tpu.pipeline_mode<synchronous>, transform_indices = @transform_2, window_bounds = array<i64: 1, 32>}, {transform_indices = @transform_3, window_bounds = array<i64: 64, 32>}]} {
    %c0 = arith.constant 0 : index
    %c0_0 = arith.constant 0 : index
    %0 = vector.load %arg1[%c0, %c0_0] : memref<64x16xf32, #tpu.memory_space<vmem>>, vector<64x16xf32>
    %1 = arith.truncf %0 : vector<64x16xf32> to vector<64x16xbf16>
    %c0_1 = arith.constant 0 : index
    %c0_2 = arith.constant 0 : index
    %2 = vector.load %arg2[%c0_1, %c0_2] : memref<16x32xf32, #tpu.memory_space<vmem>>, vector<16x32xf32>
    %3 = arith.truncf %2 : vector<16x32xf32> to vector<16x32xbf16>
    %cst = arith.constant dense<0.000000e+00> : vector<64x32xf32>
    %4 = tpu.matmul %1, %3, %cst {dimension_numbers = #tpu.dot_dimension_numbers<[1], [0], [0], [1], [0, 0, 1, 1], [], []>} : vector<64x16xbf16>, vector<16x32xbf16>, vector<64x32xf32> -> vector<64x32xf32>
    %c0_3 = arith.constant 0 : index
    %c0_4 = arith.constant 0 : index
    %5 = vector.load %arg3[%c0_3, %c0_4] : memref<1x32xf32, #tpu.memory_space<vmem>>, vector<1x32xf32>
    %6 = vector.broadcast %5 : vector<1x32xf32> to vector<64x32xf32>
    %7 = arith.addf %4, %6 : vector<64x32xf32>
    %cst_5 = arith.constant 0.000000e+00 : f32
    %8 = vector.broadcast %cst_5 : f32 to vector<64x32xf32>
    %9 = arith.maximumf %7, %8 : vector<64x32xf32>
    %c0_6 = arith.constant 0 : index
    %c0_7 = arith.constant 0 : index
    %10 = vector.load %arg4[%c0_6, %c0_7] : memref<64x32xf32, #tpu.memory_space<vmem>>, vector<64x32xf32>
    tpu.vector_store %arg4[%c0_6, %c0_7], %9 {strides = array<i32>} : memref<64x32xf32, #tpu.memory_space<vmem>>, vector<64x32xf32>,
    return
  }
  func.func @transform_0(%arg0: i32) -> (i32, i32) {
    %c0_i32 = arith.constant 0 : i32
    %c0_i32_0 = arith.constant 0 : i32
    return %arg0, %c0_i32 : i32, i32
  }
  func.func @transform_1(%arg0: i32) -> (i32, i32) {
    %c0_i32 = arith.constant 0 : i32
    %c0_i32_0 = arith.constant 0 : i32
    %c0_i32_1 = arith.constant 0 : i32
    return %c0_i32, %c0_i32_0 : i32, i32
  }
  func.func @transform_2(%arg0: i32) -> (i32, i32) {
    %c0_i32 = arith.constant 0 : i32
    %c0_i32_0 = arith.constant 0 : i32
    %c0_i32_1 = arith.constant 0 : i32
    return %c0_i32, %c0_i32_0 : i32, i32
  }
  func.func @transform_3(%arg0: i32) -> (i32, i32) {
    %c0_i32 = arith.constant 0 : i32
    %c0_i32_0 = arith.constant 0 : i32
    return %arg0, %c0_i32 : i32, i32
  }
}

module attributes {stable_mosaic.version = 11 : i64} {
  func.func @kernel(%arg0: i32, %arg1: memref<64x32xf32, #tpu.memory_space<vmem>>, %arg2: memref<32x32xf32, #tpu.memory_space<vmem>>, %arg3: memref<1x32xf32, #tpu.memory_space<vmem>>, %arg4: memref<32x32xf32, #tpu.memory_space<vmem>>, %arg5: memref<1x32xf32, #tpu.memory_space<vmem>>, %arg6: memref<1x32xf32, #tpu.memory_space<vmem>>, %arg7: memref<1x32xf32, #tpu.memory_space<vmem>>, %arg8: memref<64x32xf32, #tpu.memory_space<vmem>>, %arg9: memref<64x32xf32, #tpu.memory_space<vmem>>) attributes {dimension_semantics = [#tpu.dimension_semantics<parallel>], iteration_bounds = array<i64: 1>, scalar_prefetch = 0 : i64, scratch_operands = 0 : i64, tpu.core_type = #tpu.core_type<tc>, window_params = [{transform_indices = @transform_0, window_bounds = array<i64: 64, 32>}, {pipeline_mode = #tpu.pipeline_mode<synchronous>, transform_indices = @transform_1, window_bounds = array<i64: 32, 32>}, {pipeline_mode = #tpu.pipeline_mode<synchronous>, transform_indices = @transform_2, window_bounds = array<i64: 1, 32>}, {pipeline_mode = #tpu.pipeline_mode<synchronous>, transform_indices = @transform_3, window_bounds = array<i64: 32, 32>}, {pipeline_mode = #tpu.pipeline_mode<synchronous>, transform_indices = @transform_4, window_bounds = array<i64: 1, 32>}, {pipeline_mode = #tpu.pipeline_mode<synchronous>, transform_indices = @transform_5, window_bounds = array<i64: 1, 32>}, {pipeline_mode = #tpu.pipeline_mode<synchronous>, transform_indices = @transform_6, window_bounds = array<i64: 1, 32>}, {transform_indices = @transform_7, window_bounds = array<i64: 64, 32>}, {transform_indices = @transform_8, window_bounds = array<i64: 64, 32>}]} {
    %c0 = arith.constant 0 : index
    %c0_0 = arith.constant 0 : index
    %0 = vector.load %arg1[%c0, %c0_0] : memref<64x32xf32, #tpu.memory_space<vmem>>, vector<64x32xf32>
    %1 = arith.truncf %0 : vector<64x32xf32> to vector<64x32xbf16>
    %c0_1 = arith.constant 0 : index
    %c0_2 = arith.constant 0 : index
    %2 = vector.load %arg2[%c0_1, %c0_2] : memref<32x32xf32, #tpu.memory_space<vmem>>, vector<32x32xf32>
    %3 = arith.truncf %2 : vector<32x32xf32> to vector<32x32xbf16>
    %cst = arith.constant dense<0.000000e+00> : vector<64x32xf32>
    %4 = tpu.matmul %1, %3, %cst {dimension_numbers = #tpu.dot_dimension_numbers<[1], [0], [0], [1], [0, 0, 1, 1], [], []>} : vector<64x32xbf16>, vector<32x32xbf16>, vector<64x32xf32> -> vector<64x32xf32>
    %c0_3 = arith.constant 0 : index
    %c0_4 = arith.constant 0 : index
    %5 = vector.load %arg3[%c0_3, %c0_4] : memref<1x32xf32, #tpu.memory_space<vmem>>, vector<1x32xf32>
    %6 = vector.broadcast %5 : vector<1x32xf32> to vector<64x32xf32>
    %7 = arith.addf %4, %6 : vector<64x32xf32>
    %c0_5 = arith.constant 0 : index
    %c0_6 = arith.constant 0 : index
    %8 = vector.load %arg8[%c0_5, %c0_6] : memref<64x32xf32, #tpu.memory_space<vmem>>, vector<64x32xf32>
    tpu.vector_store %arg8[%c0_5, %c0_6], %7 {strides = array<i32>} : memref<64x32xf32, #tpu.memory_space<vmem>>, vector<64x32xf32>,
    %9 = arith.truncf %7 : vector<64x32xf32> to vector<64x32xbf16>
    %c0_7 = arith.constant 0 : index
    %c0_8 = arith.constant 0 : index
    %10 = vector.load %arg4[%c0_7, %c0_8] : memref<32x32xf32, #tpu.memory_space<vmem>>, vector<32x32xf32>
    %11 = arith.truncf %10 : vector<32x32xf32> to vector<32x32xbf16>
    %cst_9 = arith.constant dense<0.000000e+00> : vector<64x32xf32>
    %12 = tpu.matmul %9, %11, %cst_9 {dimension_numbers = #tpu.dot_dimension_numbers<[1], [0], [0], [1], [0, 0, 1, 1], [], []>} : vector<64x32xbf16>, vector<32x32xbf16>, vector<64x32xf32> -> vector<64x32xf32>
    %c0_10 = arith.constant 0 : index
    %c0_11 = arith.constant 0 : index
    %13 = vector.load %arg5[%c0_10, %c0_11] : memref<1x32xf32, #tpu.memory_space<vmem>>, vector<1x32xf32>
    %14 = vector.broadcast %13 : vector<1x32xf32> to vector<64x32xf32>
    %15 = arith.addf %12, %14 : vector<64x32xf32>
    %cst_12 = arith.constant 0.000000e+00 : f32
    %16 = vector.broadcast %cst_12 : f32 to vector<64x32xf32>
    %17 = arith.maximumf %15, %16 : vector<64x32xf32>
    %cst_13 = arith.constant dense<0.000000e+00> : vector<64xf32>
    %18 = vector.multi_reduction <add>, %17, %cst_13 [1] : vector<64x32xf32> to vector<64xf32>
    %19 = vector.shape_cast %18 : vector<64xf32> to vector<64x1xf32>
    %cst_14 = arith.constant 3.200000e+01 : f32
    %20 = vector.broadcast %cst_14 : f32 to vector<64x1xf32>
    %21 = arith.divf %19, %20 : vector<64x1xf32>
    %22 = vector.broadcast %21 : vector<64x1xf32> to vector<64x32xf32>
    %23 = arith.subf %17, %22 : vector<64x32xf32>
    %24 = arith.mulf %23, %23 : vector<64x32xf32>
    %cst_15 = arith.constant dense<0.000000e+00> : vector<64xf32>
    %25 = vector.multi_reduction <add>, %24, %cst_15 [1] : vector<64x32xf32> to vector<64xf32>
    %26 = vector.shape_cast %25 : vector<64xf32> to vector<64x1xf32>
    %cst_16 = arith.constant 3.200000e+01 : f32
    %27 = vector.broadcast %cst_16 : f32 to vector<64x1xf32>
    %28 = arith.divf %26, %27 : vector<64x1xf32>
    %29 = vector.broadcast %21 : vector<64x1xf32> to vector<64x32xf32>
    %30 = arith.subf %17, %29 : vector<64x32xf32>
    %cst_17 = arith.constant 9.99999974E-6 : f32
    %31 = vector.broadcast %cst_17 : f32 to vector<64x1xf32>
    %32 = arith.addf %28, %31 : vector<64x1xf32>
    %33 = math.rsqrt %32 : vector<64x1xf32>
    %34 = vector.broadcast %33 : vector<64x1xf32> to vector<64x32xf32>
    %35 = arith.mulf %30, %34 : vector<64x32xf32>
    %c0_18 = arith.constant 0 : index
    %c0_19 = arith.constant 0 : index
    %36 = vector.load %arg6[%c0_18, %c0_19] : memref<1x32xf32, #tpu.memory_space<vmem>>, vector<1x32xf32>
    %37 = vector.broadcast %36 : vector<1x32xf32> to vector<64x32xf32>
    %38 = arith.mulf %35, %37 : vector<64x32xf32>
    %c0_20 = arith.constant 0 : index
    %c0_21 = arith.constant 0 : index
    %39 = vector.load %arg7[%c0_20, %c0_21] : memref<1x32xf32, #tpu.memory_space<vmem>>, vector<1x32xf32>
    %40 = vector.broadcast %39 : vector<1x32xf32> to vector<64x32xf32>
    %41 = arith.addf %38, %40 : vector<64x32xf32>
    %c0_22 = arith.constant 0 : index
    %c0_23 = arith.constant 0 : index
    %42 = vector.load %arg9[%c0_22, %c0_23] : memref<64x32xf32, #tpu.memory_space<vmem>>, vector<64x32xf32>
    tpu.vector_store %arg9[%c0_22, %c0_23], %41 {strides = array<i32>} : memref<64x32xf32, #tpu.memory_space<vmem>>, vector<64x32xf32>,
    return
  }
  func.func @transform_0(%arg0: i32) -> (i32, i32) {
    %c0_i32 = arith.constant 0 : i32
    %c0_i32_0 = arith.constant 0 : i32
    return %arg0, %c0_i32 : i32, i32
  }
  func.func @transform_1(%arg0: i32) -> (i32, i32) {
    %c0_i32 = arith.constant 0 : i32
    %c0_i32_0 = arith.constant 0 : i32
    %c0_i32_1 = arith.constant 0 : i32
    return %c0_i32, %c0_i32_0 : i32, i32
  }
  func.func @transform_2(%arg0: i32) -> (i32, i32) {
    %c0_i32 = arith.constant 0 : i32
    %c0_i32_0 = arith.constant 0 : i32
    %c0_i32_1 = arith.constant 0 : i32
    return %c0_i32, %c0_i32_0 : i32, i32
  }
  func.func @transform_3(%arg0: i32) -> (i32, i32) {
    %c0_i32 = arith.constant 0 : i32
    %c0_i32_0 = arith.constant 0 : i32
    %c0_i32_1 = arith.constant 0 : i32
    return %c0_i32, %c0_i32_0 : i32, i32
  }
  func.func @transform_4(%arg0: i32) -> (i32, i32) {
    %c0_i32 = arith.constant 0 : i32
    %c0_i32_0 = arith.constant 0 : i32
    %c0_i32_1 = arith.constant 0 : i32
    return %c0_i32, %c0_i32_0 : i32, i32
  }
  func.func @transform_5(%arg0: i32) -> (i32, i32) {
    %c0_i32 = arith.constant 0 : i32
    %c0_i32_0 = arith.constant 0 : i32
    %c0_i32_1 = arith.constant 0 : i32
    return %c0_i32, %c0_i32_0 : i32, i32
  }
  func.func @transform_6(%arg0: i32) -> (i32, i32) {
    %c0_i32 = arith.constant 0 : i32
    %c0_i32_0 = arith.constant 0 : i32
    %c0_i32_1 = arith.constant 0 : i32
    return %c0_i32, %c0_i32_0 : i32, i32
  }
  func.func @transform_7(%arg0: i32) -> (i32, i32) {
    %c0_i32 = arith.constant 0 : i32
    %c0_i32_0 = arith.constant 0 : i32
    return %arg0, %c0_i32 : i32, i32
  }
  func.func @transform_8(%arg0: i32) -> (i32, i32) {
    %c0_i32 = arith.constant 0 : i32
    %c0_i32_0 = arith.constant 0 : i32
    return %arg0, %c0_i32 : i32, i32
  }
}

module attributes {stable_mosaic.version = 11 : i64} {
  func.func @kernel(%arg0: i32, %arg1: memref<128x32xf32, #tpu.memory_space<vmem>>, %arg2: memref<128x1xi32, #tpu.memory_space<vmem>>, %arg3: memref<96x32xf32, #tpu.memory_space<vmem>>, %arg4: memref<128x32xf32, #tpu.memory_space<vmem>>) attributes {dimension_semantics = [#tpu.dimension_semantics<parallel>], iteration_bounds = array<i64: 1>, scalar_prefetch = 0 : i64, scratch_operands = 0 : i64, tpu.core_type = #tpu.core_type<tc>, window_params = [{transform_indices = @transform_0, window_bounds = array<i64: 128, 32>}, {transform_indices = @transform_1, window_bounds = array<i64: 128, 1>}, {pipeline_mode = #tpu.pipeline_mode<synchronous>, transform_indices = @transform_2, window_bounds = array<i64: 96, 32>}, {transform_indices = @transform_3, window_bounds = array<i64: 128, 32>}]} {
    %c0 = arith.constant 0 : index
    %c0_0 = arith.constant 0 : index
    %0 = vector.load %arg1[%c0, %c0_0] : memref<128x32xf32, #tpu.memory_space<vmem>>, vector<128x32xf32>
    %1 = arith.truncf %0 : vector<128x32xf32> to vector<128x32xbf16>
    %c0_1 = arith.constant 0 : index
    %c0_2 = arith.constant 0 : index
    %2 = vector.load %arg2[%c0_1, %c0_2] : memref<128x1xi32, #tpu.memory_space<vmem>>, vector<128x1xi32>
    %cst = arith.constant 0.000000e+00 : f32
    %3 = vector.broadcast %cst : f32 to vector<128x32xf32>
    %c0_3 = arith.constant 0 : index
    %c0_4 = arith.constant 0 : index
    %4 = vector.load %arg3[%c0_3, %c0_4] : memref<96x32xf32, #tpu.memory_space<vmem>>, vector<32x32xf32>
    %5 = arith.truncf %4 : vector<32x32xf32> to vector<32x32xbf16>
    %cst_5 = arith.constant dense<0.000000e+00> : vector<128x32xf32>
    %6 = tpu.matmul %1, %5, %cst_5 {dimension_numbers = #tpu.dot_dimension_numbers<[1], [0], [0], [1], [0, 0, 1, 1], [], []>} : vector<128x32xbf16>, vector<32x32xbf16>, vector<128x32xf32> -> vector<128x32xf32>
    %c0_i32 = arith.constant 0 : i32
    %7 = vector.broadcast %c0_i32 : i32 to vector<128x1xi32>
    %8 = arith.cmpi eq, %2, %7 : vector<128x1xi32>
    %9 = arith.extui %8 : vector<128x1xi1> to vector<128x1xi32>
    %10 = arith.sitofp %9 : vector<128x1xi32> to vector<128x1xf32>
    %11 = vector.broadcast %10 : vector<128x1xf32> to vector<128x32xf32>
    %12 = arith.mulf %6, %11 : vector<128x32xf32>
    %13 = arith.addf %3, %12 : vector<128x32xf32>
    %c32 = arith.constant 32 : index
    %c0_6 = arith.constant 0 : index
    %14 = vector.load %arg3[%c32, %c0_6] : memref<96x32xf32, #tpu.memory_space<vmem>>, vector<32x32xf32>
    %15 = arith.truncf %14 : vector<32x32xf32> to vector<32x32xbf16>
    %cst_7 = arith.constant dense<0.000000e+00> : vector<128x32xf32>
    %16 = tpu.matmul %1, %15, %cst_7 {dimension_numbers = #tpu.dot_dimension_numbers<[1], [0], [0], [1], [0, 0, 1, 1], [], []>} : vector<128x32xbf16>, vector<32x32xbf16>, vector<128x32xf32> -> vector<128x32xf32>
    %c1_i32 = arith.constant 1 : i32
    %17 = vector.broadcast %c1_i32 : i32 to vector<128x1xi32>
    %18 = arith.cmpi eq, %2, %17 : vector<128x1xi32>
    %19 = arith.extui %18 : vector<128x1xi1> to vector<128x1xi32>
    %20 = arith.sitofp %19 : vector<128x1xi32> to vector<128x1xf32>
    %21 = vector.broadcast %20 : vector<128x1xf32> to vector<128x32xf32>
    %22 = arith.mulf %16, %21 : vector<128x32xf32>
    %23 = arith.addf %13, %22 : vector<128x32xf32>
    %c64 = arith.constant 64 : index
    %c0_8 = arith.constant 0 : index
    %24 = vector.load %arg3[%c64, %c0_8] : memref<96x32xf32, #tpu.memory_space<vmem>>, vector<32x32xf32>
    %25 = arith.truncf %24 : vector<32x32xf32> to vector<32x32xbf16>
    %cst_9 = arith.constant dense<0.000000e+00> : vector<128x32xf32>
    %26 = tpu.matmul %1, %25, %cst_9 {dimension_numbers = #tpu.dot_dimension_numbers<[1], [0], [0], [1], [0, 0, 1, 1], [], []>} : vector<128x32xbf16>, vector<32x32xbf16>, vector<128x32xf32> -> vector<128x32xf32>
    %c2_i32 = arith.constant 2 : i32
    %27 = vector.broadcast %c2_i32 : i32 to vector<128x1xi32>
    %28 = arith.cmpi eq, %2, %27 : vector<128x1xi32>
    %29 = arith.extui %28 : vector<128x1xi1> to vector<128x1xi32>
    %30 = arith.sitofp %29 : vector<128x1xi32> to vector<128x1xf32>
    %31 = vector.broadcast %30 : vector<128x1xf32> to vector<128x32xf32>
    %32 = arith.mulf %26, %31 : vector<128x32xf32>
    %33 = arith.addf %23, %32 : vector<128x32xf32>
    %c0_10 = arith.constant 0 : index
    %c0_11 = arith.constant 0 : index
    %34 = vector.load %arg4[%c0_10, %c0_11] : memref<128x32xf32, #tpu.memory_space<vmem>>, vector<128x32xf32>
    tpu.vector_store %arg4[%c0_10, %c0_11], %33 {strides = array<i32>} : memref<128x32xf32, #tpu.memory_space<vmem>>, vector<128x32xf32>,
    return
  }
  func.func @transform_0(%arg0: i32) -> (i32, i32) {
    %c0_i32 = arith.constant 0 : i32
    %c0_i32_0 = arith.constant 0 : i32
    return %arg0, %c0_i32 : i32, i32
  }
  func.func @transform_1(%arg0: i32) -> (i32, i32) {
    %c0_i32 = arith.constant 0 : i32
    %c0_i32_0 = arith.constant 0 : i32
    return %arg0, %c0_i32 : i32, i32
  }
  func.func @transform_2(%arg0: i32) -> (i32, i32) {
    %c0_i32 = arith.constant 0 : i32
    %c0_i32_0 = arith.constant 0 : i32
    %c0_i32_1 = arith.constant 0 : i32
    return %c0_i32, %c0_i32_0 : i32, i32
  }
  func.func @transform_3(%arg0: i32) -> (i32, i32) {
    %c0_i32 = arith.constant 0 : i32
    %c0_i32_0 = arith.constant 0 : i32
    return %arg0, %c0_i32 : i32, i32
  }
}

module attributes {stable_mosaic.version = 11 : i64} {
  func.func @kernel(%arg0: i32, %arg1: i32, %arg2: memref<64x32xf32, #tpu.memory_space<vmem>>, %arg3: memref<1x128xi32, #tpu.memory_space<vmem>>, %arg4: memref<128x96xbf16, #tpu.memory_space<vmem>>, %arg5: memref<32x32xf32, #tpu.memory_space<vmem>>, %arg6: memref<1x32xf32, #tpu.memory_space<vmem>>, %arg7: memref<1x32xf32, #tpu.memory_space<vmem>>, %arg8: memref<1x32xf32, #tpu.memory_space<vmem>>, %arg9: memref<64x32xf32, #tpu.memory_space<vmem>>, %arg10: memref<64x96xf32, #tpu.memory_space<vmem>>) attributes {dimension_semantics = [#tpu.dimension_semantics<parallel>, #tpu.dimension_semantics<arbitrary>], iteration_bounds = array<i64: 1, 1>, scalar_prefetch = 0 : i64, scratch_operands = 1 : i64, tpu.core_type = #tpu.core_type<tc>, window_params = [{transform_indices = @transform_0, window_bounds = array<i64: 64, 32>}, {transform_indices = @transform_1, window_bounds = array<i64: 1, 128>}, {transform_indices = @transform_2, window_bounds = array<i64: 128, 96>}, {pipeline_mode = #tpu.pipeline_mode<synchronous>, transform_indices = @transform_3, window_bounds = array<i64: 32, 32>}, {pipeline_mode = #tpu.pipeline_mode<synchronous>, transform_indices = @transform_4, window_bounds = array<i64: 1, 32>}, {pipeline_mode = #tpu.pipeline_mode<synchronous>, transform_indices = @transform_5, window_bounds = array<i64: 1, 32>}, {pipeline_mode = #tpu.pipeline_mode<synchronous>, transform_indices = @transform_6, window_bounds = array<i64: 1, 32>}, {transform_indices = @transform_7, window_bounds = array<i64: 64, 32>}]} {
    %c0_i32 = arith.constant 0 : i32
    %0 = arith.cmpi eq, %arg1, %c0_i32 : i32
    %1 = arith.extui %0 : i1 to i32
    %c0_i32_0 = arith.constant 0 : i32
    %2 = arith.cmpi ne, %1, %c0_i32_0 : i32
    scf.if %2 {
      %cst_10 = arith.constant 0.000000e+00 : f32
      %21 = vector.broadcast %cst_10 : f32 to vector<64x96xf32>
      %c0_11 = arith.constant 0 : index
      %c0_12 = arith.constant 0 : index
      %22 = vector.load %arg10[%c0_11, %c0_12] : memref<64x96xf32, #tpu.memory_space<vmem>>, vector<64x96xf32>
      tpu.vector_store %arg10[%c0_11, %c0_12], %21 {strides = array<i32>} : memref<64x96xf32, #tpu.memory_space<vmem>>, vector<64x96xf32>,
    } else {
    }
    %c64_i32 = arith.constant 64 : i32
    %3 = arith.muli %arg0, %c64_i32 : i32
    %4 = tpu.iota {dimensions = array<i32: 0>} : vector<64x128xi32>
    %5 = vector.broadcast %3 : i32 to vector<64x128xi32>
    %6 = arith.addi %5, %4 : vector<64x128xi32>
    %c0 = arith.constant 0 : index
    %c0_1 = arith.constant 0 : index
    %7 = vector.load %arg3[%c0, %c0_1] : memref<1x128xi32, #tpu.memory_space<vmem>>, vector<1x128xi32>
    %8 = vector.broadcast %7 : vector<1x128xi32> to vector<64x128xi32>
    %9 = arith.cmpi eq, %6, %8 : vector<64x128xi32>
    %10 = arith.extui %9 : vector<64x128xi1> to vector<64x128xi32>
    %11 = arith.sitofp %10 : vector<64x128xi32> to vector<64x128xf32>
    %12 = arith.truncf %11 : vector<64x128xf32> to vector<64x128xbf16>
    %c0_2 = arith.constant 0 : index
    %c0_3 = arith.constant 0 : index
    %13 = vector.load %arg10[%c0_2, %c0_3] : memref<64x96xf32, #tpu.memory_space<vmem>>, vector<64x96xf32>
    %c0_4 = arith.constant 0 : index
    %c0_5 = arith.constant 0 : index
    %14 = vector.load %arg4[%c0_4, %c0_5] : memref<128x96xbf16, #tpu.memory_space<vmem>>, vector<128x96xbf16>
    %cst = arith.constant dense<0.000000e+00> : vector<64x96xf32>
    %15 = tpu.matmul %12, %14, %cst {dimension_numbers = #tpu.dot_dimension_numbers<[1], [0], [0], [1], [0, 0, 1, 1], [], []>} : vector<64x128xbf16>, vector<128x96xbf16>, vector<64x96xf32> -> vector<64x96xf32>
    %16 = arith.addf %13, %15 : vector<64x96xf32>
    %c0_6 = arith.constant 0 : index
    %c0_7 = arith.constant 0 : index
    %17 = vector.load %arg10[%c0_6, %c0_7] : memref<64x96xf32, #tpu.memory_space<vmem>>, vector<64x96xf32>
    tpu.vector_store %arg10[%c0_6, %c0_7], %16 {strides = array<i32>} : memref<64x96xf32, #tpu.memory_space<vmem>>, vector<64x96xf32>,
    %c0_i32_8 = arith.constant 0 : i32
    %18 = arith.cmpi eq, %arg1, %c0_i32_8 : i32
    %19 = arith.extui %18 : i1 to i32
    %c0_i32_9 = arith.constant 0 : i32
    %20 = arith.cmpi ne, %19, %c0_i32_9 : i32
    scf.if %20 {
      %c0_10 = arith.constant 0 : index
      %c0_11 = arith.constant 0 : index
      %21 = vector.load %arg10[%c0_10, %c0_11] : memref<64x96xf32, #tpu.memory_space<vmem>>, vector<64x96xf32>
      %c0_12 = arith.constant 0 : index
      %c0_13 = arith.constant 0 : index
      %22 = vector.load %arg2[%c0_12, %c0_13] : memref<64x32xf32, #tpu.memory_space<vmem>>, vector<64x32xf32>
      %23 = vector.extract_strided_slice %21 {offsets = [0, 0], sizes = [64, 32], strides = [1, 1]} : vector<64x96xf32> to vector<64x32xf32>
      %24 = arith.addf %22, %23 : vector<64x32xf32>
      %25 = vector.extract_strided_slice %21 {offsets = [0, 32], sizes = [64, 32], strides = [1, 1]} : vector<64x96xf32> to vector<64x32xf32>
      %26 = vector.extract_strided_slice %21 {offsets = [0, 64], sizes = [64, 32], strides = [1, 1]} : vector<64x96xf32> to vector<64x32xf32>
      %cst_14 = arith.constant 1.000000e+00 : f32
      %27 = vector.broadcast %cst_14 : f32 to vector<64x32xf32>
      %28 = arith.maximumf %26, %27 : vector<64x32xf32>
      %29 = tpu.reciprocal %28 {approx = true} : vector<64x32xf32> -> vector<64x32xf32>
      %cst_15 = arith.constant 0.000000e+00 : f32
      %30 = vector.broadcast %cst_15 : f32 to vector<64x32xf32>
      %31 = arith.cmpf ogt, %26, %30 : vector<64x32xf32>
      %32 = arith.mulf %25, %29 : vector<64x32xf32>
      %cst_16 = arith.constant 0.000000e+00 : f32
      %33 = vector.broadcast %cst_16 : f32 to vector<64x32xf32>
      %34 = arith.select %31, %32, %33 : vector<64x32xi1>, vector<64x32xf32>
      %cst_17 = arith.constant 0.000000e+00 : f32
      %35 = vector.broadcast %cst_17 : f32 to vector<64x32xf32>
      %36 = arith.maximumf %34, %35 : vector<64x32xf32>
      %cst_18 = arith.constant 1.000000e-01 : f32
      %37 = vector.broadcast %cst_18 : f32 to vector<64x32xf32>
      %38 = arith.mulf %37, %36 : vector<64x32xf32>
      %39 = arith.addf %24, %38 : vector<64x32xf32>
      %40 = arith.truncf %39 : vector<64x32xf32> to vector<64x32xbf16>
      %c0_19 = arith.constant 0 : index
      %c0_20 = arith.constant 0 : index
      %41 = vector.load %arg5[%c0_19, %c0_20] : memref<32x32xf32, #tpu.memory_space<vmem>>, vector<32x32xf32>
      %42 = arith.truncf %41 : vector<32x32xf32> to vector<32x32xbf16>
      %cst_21 = arith.constant dense<0.000000e+00> : vector<64x32xf32>
      %43 = tpu.matmul %40, %42, %cst_21 {dimension_numbers = #tpu.dot_dimension_numbers<[1], [0], [0], [1], [0, 0, 1, 1], [], []>} : vector<64x32xbf16>, vector<32x32xbf16>, vector<64x32xf32> -> vector<64x32xf32>
      %c0_22 = arith.constant 0 : index
      %c0_23 = arith.constant 0 : index
      %44 = vector.load %arg6[%c0_22, %c0_23] : memref<1x32xf32, #tpu.memory_space<vmem>>, vector<1x32xf32>
      %45 = vector.broadcast %44 : vector<1x32xf32> to vector<64x32xf32>
      %46 = arith.addf %43, %45 : vector<64x32xf32>
      %cst_24 = arith.constant dense<0.000000e+00> : vector<64xf32>
      %47 = vector.multi_reduction <add>, %46, %cst_24 [1] : vector<64x32xf32> to vector<64xf32>
      %48 = vector.shape_cast %47 : vector<64xf32> to vector<64x1xf32>
      %cst_25 = arith.constant 3.200000e+01 : f32
      %49 = vector.broadcast %cst_25 : f32 to vector<64x1xf32>
      %50 = arith.divf %48, %49 : vector<64x1xf32>
      %51 = vector.broadcast %50 : vector<64x1xf32> to vector<64x32xf32>
      %52 = arith.subf %46, %51 : vector<64x32xf32>
      %53 = arith.mulf %52, %52 : vector<64x32xf32>
      %cst_26 = arith.constant dense<0.000000e+00> : vector<64xf32>
      %54 = vector.multi_reduction <add>, %53, %cst_26 [1] : vector<64x32xf32> to vector<64xf32>
      %55 = vector.shape_cast %54 : vector<64xf32> to vector<64x1xf32>
      %cst_27 = arith.constant 3.200000e+01 : f32
      %56 = vector.broadcast %cst_27 : f32 to vector<64x1xf32>
      %57 = arith.divf %55, %56 : vector<64x1xf32>
      %58 = vector.broadcast %50 : vector<64x1xf32> to vector<64x32xf32>
      %59 = arith.subf %46, %58 : vector<64x32xf32>
      %cst_28 = arith.constant 9.99999974E-6 : f32
      %60 = vector.broadcast %cst_28 : f32 to vector<64x1xf32>
      %61 = arith.addf %57, %60 : vector<64x1xf32>
      %62 = math.rsqrt %61 : vector<64x1xf32>
      %63 = vector.broadcast %62 : vector<64x1xf32> to vector<64x32xf32>
      %64 = arith.mulf %59, %63 : vector<64x32xf32>
      %c0_29 = arith.constant 0 : index
      %c0_30 = arith.constant 0 : index
      %65 = vector.load %arg7[%c0_29, %c0_30] : memref<1x32xf32, #tpu.memory_space<vmem>>, vector<1x32xf32>
      %66 = vector.broadcast %65 : vector<1x32xf32> to vector<64x32xf32>
      %67 = arith.mulf %64, %66 : vector<64x32xf32>
      %c0_31 = arith.constant 0 : index
      %c0_32 = arith.constant 0 : index
      %68 = vector.load %arg8[%c0_31, %c0_32] : memref<1x32xf32, #tpu.memory_space<vmem>>, vector<1x32xf32>
      %69 = vector.broadcast %68 : vector<1x32xf32> to vector<64x32xf32>
      %70 = arith.addf %67, %69 : vector<64x32xf32>
      %c0_33 = arith.constant 0 : index
      %c0_34 = arith.constant 0 : index
      %71 = vector.load %arg9[%c0_33, %c0_34] : memref<64x32xf32, #tpu.memory_space<vmem>>, vector<64x32xf32>
      tpu.vector_store %arg9[%c0_33, %c0_34], %70 {strides = array<i32>} : memref<64x32xf32, #tpu.memory_space<vmem>>, vector<64x32xf32>,
    } else {
    }
    return
  }
  func.func @transform_0(%arg0: i32, %arg1: i32) -> (i32, i32) {
    %c0_i32 = arith.constant 0 : i32
    %c0_i32_0 = arith.constant 0 : i32
    return %arg0, %c0_i32 : i32, i32
  }
  func.func @transform_1(%arg0: i32, %arg1: i32) -> (i32, i32) {
    %c0_i32 = arith.constant 0 : i32
    %c0_i32_0 = arith.constant 0 : i32
    return %c0_i32, %arg1 : i32, i32
  }
  func.func @transform_2(%arg0: i32, %arg1: i32) -> (i32, i32) {
    %c0_i32 = arith.constant 0 : i32
    %c0_i32_0 = arith.constant 0 : i32
    return %arg1, %c0_i32 : i32, i32
  }
  func.func @transform_3(%arg0: i32, %arg1: i32) -> (i32, i32) {
    %c0_i32 = arith.constant 0 : i32
    %c0_i32_0 = arith.constant 0 : i32
    %c0_i32_1 = arith.constant 0 : i32
    return %c0_i32, %c0_i32_0 : i32, i32
  }
  func.func @transform_4(%arg0: i32, %arg1: i32) -> (i32, i32) {
    %c0_i32 = arith.constant 0 : i32
    %c0_i32_0 = arith.constant 0 : i32
    %c0_i32_1 = arith.constant 0 : i32
    return %c0_i32, %c0_i32_0 : i32, i32
  }
  func.func @transform_5(%arg0: i32, %arg1: i32) -> (i32, i32) {
    %c0_i32 = arith.constant 0 : i32
    %c0_i32_0 = arith.constant 0 : i32
    %c0_i32_1 = arith.constant 0 : i32
    return %c0_i32, %c0_i32_0 : i32, i32
  }
  func.func @transform_6(%arg0: i32, %arg1: i32) -> (i32, i32) {
    %c0_i32 = arith.constant 0 : i32
    %c0_i32_0 = arith.constant 0 : i32
    %c0_i32_1 = arith.constant 0 : i32
    return %c0_i32, %c0_i32_0 : i32, i32
  }
  func.func @transform_7(%arg0: i32, %arg1: i32) -> (i32, i32) {
    %c0_i32 = arith.constant 0 : i32
    %c0_i32_0 = arith.constant 0 : i32
    return %arg0, %c0_i32 : i32, i32
  }
}

</mosaic_0001>

<llo_original>
// kernel: mul.1
$region0: #{mul.1}
  #allocation0 [shape = 's32[1]{0}', space=sflag, size = 0x4, scoped, tag = 'scoped memory for mul.1']
  %s0 = inlined_call_operand.vmem [shape: f32[128], index: 0, kind: input, shape index: {}]
  %s1 = inlined_call_operand.vmem [shape: f32[128], index: 1, kind: input, shape index: {}]
  %s2 = inlined_call_operand.vmem [shape: f32[128], index: 2, kind: output, shape index: {}]
  %v3 = vld [vmem:[%s0] sm:$0x1]
  %v4 = vld [vmem:[%s1] sm:$0x1]
  %5 = xla_tuple %v3, %v4
  %6 = xla_tuple %5
  %v7 = vmul.f32 %v3, %v4
  %8 = xla_tuple %v7
  %9 = vst [vmem:[%s2] sm:$0x1] %v7

// kernel: gnn_conv_forward.7
$region0: #{gnn_conv_forward.7}
  #allocation0 [shape = 'u32[]', space=smem, size = 0x4, offset = 0x4, fixed_abs, tag = 'smem constant byte address 0x4 - core index']
  #allocation1 [shape = 'u32[72,128]{1,0:T(1,128)}', space=vmem, size = 0x9000, scoped, tag = 'internal scratch']
  %s0 = inlined_call_operand.vmem [shape: f32[64,16], index: 0, kind: input, shape index: {}]
  %s1 = inlined_call_operand.vmem [shape: f32[16,32], index: 1, kind: input, shape index: {}]
  %s2 = inlined_call_operand.vmem [shape: f32[1,32], index: 2, kind: input, shape index: {}]
  %s3 = inlined_call_operand.vmem [shape: f32[64,32], index: 3, kind: output, shape index: {}]
  %s4 = sld [smem:[#allocation0]]
  $region22: #{gnn_conv_forward.7} parent=0
    _
  %s6 = ssub.s32 1, %s4
  %s7 = scalar_select 0, %s6, %s4
  // Predicated region
  $region2: #{gnn_conv_forward.7} parent=0 // pred_check
    _
  $region3: #{gnn_conv_forward.7} parent=0 // pred_check_branch
    %9 = sbr.rel (0) target = $region5
  $region4: #{gnn_conv_forward.7} parent=0 // pred_region
    _
  $region5: #{gnn_conv_forward.7} parent=0 // pred_fallthru
    _
  // Predicated region
  $region6: #{gnn_conv_forward.7} parent=0 // pred_check
    _
  $region7: #{gnn_conv_forward.7} parent=0 // pred_check_branch
    %11 = sbr.rel (0) target = $region9
  $region8: #{gnn_conv_forward.7} parent=0 // pred_region
    _
  $region9: #{gnn_conv_forward.7} parent=0 // pred_fallthru
    _
  // Predicated region
  $region10: #{gnn_conv_forward.7} parent=0 // pred_check
    _
  $region11: #{gnn_conv_forward.7} parent=0 // pred_check_branch
    %13 = sbr.rel (0) target = $region13
  $region12: #{gnn_conv_forward.7} parent=0 // pred_region
    _
  $region13: #{gnn_conv_forward.7} parent=0 // pred_fallthru
    _
  %v15 = vld [vmem:[%s0] sm:$0xff]
  %v16 = vld [vmem:[%s0 + $0x8] sm:$0xff]
  %v17 = vld [vmem:[%s0 + $0x10] sm:$0xff]
  %v18 = vld [vmem:[%s0 + $0x18] sm:$0xff]
  %v19 = vld [vmem:[%s0 + $0x20] sm:$0xff]
  %v20 = vld [vmem:[%s0 + $0x28] sm:$0xff]
  %v21 = vld [vmem:[%s0 + $0x30] sm:$0xff]
  %v22 = vld [vmem:[%s0 + $0x38] sm:$0xff]
  %v23 = vpack.c.bf16 %v16, %v15
  %v24 = vpack.c.bf16 %v18, %v17
  %v25 = vpack.c.bf16 %v20, %v19
  %v26 = vpack.c.bf16 %v22, %v21
  %v27 = vld [vmem:[%s1] sm:$0xff]
  %v28 = vld [vmem:[%s1 + $0x8] sm:$0xff]
  %v29 = vpack.c.bf16 %v28, %v27
  %v30 = vld [vmem:[%s2] sm:$0x1]
  %v32 = vperm.slane %v30, 0
  %vm34 = vcmask 130048
  %v36 = vsel %vm34, %v23, 0
  %v39 = vsel %vm34, %v24, 0
  %v42 = vsel %vm34, %v25, 0
  %v45 = vsel %vm34, %v26, 0
  %47 = vmatpush.bf16.msra.mxu0 0
  %48 = vmatpush.bf16.msra.mxu0 0
  %49 = vmatpush.bf16.msra.mxu0 0
  %50 = vmatpush.bf16.msra.mxu0 0
  %51 = vmatpush.bf16.msra.mxu0 0
  %52 = vmatpush.bf16.msra.mxu0 0
  %53 = vmatpush.bf16.msra.mxu0 0
  %54 = vmatpush.bf16.msra.mxu0 %v29
  %55 = vmatmul.bf16.gmra.mxu0 %v36
  %v56 = vpop.f32.mrf.mxu0
  %v57 = vadd.f32 %v32, %v56
  %v58 = vpop.f32.mrf.mxu0
  %v59 = vadd.f32 %v32, %v58
  %60 = vmatmul.bf16.gmra.mxu0 %v39
  %v61 = vpop.f32.mrf.mxu0
  %v62 = vadd.f32 %v32, %v61
  %v63 = vpop.f32.mrf.mxu0
  %v64 = vadd.f32 %v32, %v63
  %65 = vmatmul.bf16.gmra.mxu0 %v42
  %v66 = vpop.f32.mrf.mxu0
  %v67 = vadd.f32 %v32, %v66
  %v68 = vpop.f32.mrf.mxu0
  %v69 = vadd.f32 %v32, %v68
  %70 = vmatmul.bf16.gmra.mxu0 %v45
  %v71 = vpop.f32.mrf.mxu0
  %v72 = vadd.f32 %v32, %v71
  %v73 = vpop.f32.mrf.mxu0
  %v74 = vadd.f32 %v32, %v73
  %75 = vdwg.mxu0
  %v76 = vmax.f32 %v57, 0.0
  %v77 = vmax.f32 %v59, 0.0
  %v78 = vmax.f32 %v62, 0.0
  %v79 = vmax.f32 %v64, 0.0
  %v80 = vmax.f32 %v67, 0.0
  %v81 = vmax.f32 %v69, 0.0
  %v82 = vmax.f32 %v72, 0.0
  %v83 = vmax.f32 %v74, 0.0
  %vm84 = vcmask 261120
  %85 = vst.msk [vmem:[%s3] sm:$0xff] %vm84, %v76
  %86 = vst.msk [vmem:[%s3 + $0x8] sm:$0xff] %vm84, %v77
  %87 = vst.msk [vmem:[%s3 + $0x10] sm:$0xff] %vm84, %v78
  %88 = vst.msk [vmem:[%s3 + $0x18] sm:$0xff] %vm84, %v79
  %89 = vst.msk [vmem:[%s3 + $0x20] sm:$0xff] %vm84, %v80
  %90 = vst.msk [vmem:[%s3 + $0x28] sm:$0xff] %vm84, %v81
  %91 = vst.msk [vmem:[%s3 + $0x30] sm:$0xff] %vm84, %v82
  %92 = vst.msk [vmem:[%s3 + $0x38] sm:$0xff] %vm84, %v83
  // Predicated region
  $region14: #{gnn_conv_forward.7} parent=0 // pred_check
    _
  $region15: #{gnn_conv_forward.7} parent=0 // pred_check_branch
    %94 = sbr.rel (0) target = $region17
  $region16: #{gnn_conv_forward.7} parent=0 // pred_region
    _
  $region17: #{gnn_conv_forward.7} parent=0 // pred_fallthru
    _
  // Predicated region
  $region18: #{gnn_conv_forward.7} parent=0 // pred_check
    _
  $region19: #{gnn_conv_forward.7} parent=0 // pred_check_branch
    %96 = sbr.rel (0) target = $region21
  $region20: #{gnn_conv_forward.7} parent=0 // pred_region
    _
  $region21: #{gnn_conv_forward.7} parent=0 // pred_fallthru
    _

// kernel: gnn_conv_forward.8
$region0: #{gnn_conv_forward.8}
  #allocation0 [shape = 'u32[]', space=smem, size = 0x4, offset = 0x4, fixed_abs, tag = 'smem constant byte address 0x4 - core index']
  #allocation1 [shape = 'u32[72,128]{1,0:T(1,128)}', space=vmem, size = 0x9000, scoped, tag = 'internal scratch']
  %s0 = inlined_call_operand.vmem [shape: f32[64,32], index: 0, kind: input, shape index: {}]
  %s1 = inlined_call_operand.vmem [shape: f32[32,32], index: 1, kind: input, shape index: {}]
  %s2 = inlined_call_operand.vmem [shape: f32[1,32], index: 2, kind: input, shape index: {}]
  %s3 = inlined_call_operand.vmem [shape: f32[32,32], index: 3, kind: input, shape index: {}]
  %s4 = inlined_call_operand.vmem [shape: f32[1,32], index: 4, kind: input, shape index: {}]
  %s5 = inlined_call_operand.vmem [shape: f32[1,32], index: 5, kind: input, shape index: {}]
  %s6 = inlined_call_operand.vmem [shape: f32[1,32], index: 6, kind: input, shape index: {}]
  %s7 = inlined_call_operand.vmem [shape: f32[64,32], index: 7, kind: output, shape index: {0}]
  %s8 = inlined_call_operand.vmem [shape: f32[64,32], index: 8, kind: output, shape index: {1}]
  %9 = xla_tuple %s7, %s8
  %s10 = sld [smem:[#allocation0]]
  $region46: #{gnn_conv_forward.8} parent=0
    _
  %s12 = ssub.s32 1, %s10
  %s13 = scalar_select 0, %s12, %s10
  // Predicated region
  $region2: #{gnn_conv_forward.8} parent=0 // pred_check
    _
  $region3: #{gnn_conv_forward.8} parent=0 // pred_check_branch
    %15 = sbr.rel (0) target = $region5
  $region4: #{gnn_conv_forward.8} parent=0 // pred_region
    _
  $region5: #{gnn_conv_forward.8} parent=0 // pred_fallthru
    _
  // Predicated region
  $region6: #{gnn_conv_forward.8} parent=0 // pred_check
    _
  $region7: #{gnn_conv_forward.8} parent=0 // pred_check_branch
    %17 = sbr.rel (0) target = $region9
  $region8: #{gnn_conv_forward.8} parent=0 // pred_region
    _
  $region9: #{gnn_conv_forward.8} parent=0 // pred_fallthru
    _
  // Predicated region
  $region10: #{gnn_conv_forward.8} parent=0 // pred_check
    _
  $region11: #{gnn_conv_forward.8} parent=0 // pred_check_branch
    %19 = sbr.rel (0) target = $region13
  $region12: #{gnn_conv_forward.8} parent=0 // pred_region
    _
  $region13: #{gnn_conv_forward.8} parent=0 // pred_fallthru
    _
  // Predicated region
  $region14: #{gnn_conv_forward.8} parent=0 // pred_check
    _
  $region15: #{gnn_conv_forward.8} parent=0 // pred_check_branch
    %21 = sbr.rel (0) target = $region17
  $region16: #{gnn_conv_forward.8} parent=0 // pred_region
    _
  $region17: #{gnn_conv_forward.8} parent=0 // pred_fallthru
    _
  // Predicated region
  $region18: #{gnn_conv_forward.8} parent=0 // pred_check
    _
  $region19: #{gnn_conv_forward.8} parent=0 // pred_check_branch
    %23 = sbr.rel (0) target = $region21
  $region20: #{gnn_conv_forward.8} parent=0 // pred_region
    _
  $region21: #{gnn_conv_forward.8} parent=0 // pred_fallthru
    _
  // Predicated region
  $region22: #{gnn_conv_forward.8} parent=0 // pred_check
    _
  $region23: #{gnn_conv_forward.8} parent=0 // pred_check_branch
    %25 = sbr.rel (0) target = $region25
  $region24: #{gnn_conv_forward.8} parent=0 // pred_region
    _
  $region25: #{gnn_conv_forward.8} parent=0 // pred_fallthru
    _
  // Predicated region
  $region26: #{gnn_conv_forward.8} parent=0 // pred_check
    _
  $region27: #{gnn_conv_forward.8} parent=0 // pred_check_branch
    %27 = sbr.rel (0) target = $region29
  $region28: #{gnn_conv_forward.8} parent=0 // pred_region
    _
  $region29: #{gnn_conv_forward.8} parent=0 // pred_fallthru
    _
  %v29 = vld [vmem:[%s0] sm:$0xff]
  %v30 = vld [vmem:[%s0 + $0x8] sm:$0xff]
  %v31 = vld [vmem:[%s0 + $0x10] sm:$0xff]
  %v32 = vld [vmem:[%s0 + $0x18] sm:$0xff]
  %v33 = vld [vmem:[%s0 + $0x20] sm:$0xff]
  %v34 = vld [vmem:[%s0 + $0x28] sm:$0xff]
  %v35 = vld [vmem:[%s0 + $0x30] sm:$0xff]
  %v36 = vld [vmem:[%s0 + $0x38] sm:$0xff]
  %v37 = vpack.c.bf16 %v30, %v29
  %v38 = vpack.c.bf16 %v32, %v31
  %v39 = vpack.c.bf16 %v34, %v33
  %v40 = vpack.c.bf16 %v36, %v35
  %v41 = vld [vmem:[%s1] sm:$0xff]
  %v42 = vld [vmem:[%s1 + $0x8] sm:$0xff]
  %v43 = vld [vmem:[%s1 + $0x10] sm:$0xff]
  %v44 = vld [vmem:[%s1 + $0x18] sm:$0xff]
  %v45 = vpack.c.bf16 %v42, %v41
  %v46 = vpack.c.bf16 %v44, %v43
  %v47 = vld [vmem:[%s2] sm:$0x1]
  %v49 = vperm.slane %v47, 0
  %vm51 = vcmask 261120
  %v53 = vsel %vm51, %v37, 0
  %v56 = vsel %vm51, %v38, 0
  %v59 = vsel %vm51, %v39, 0
  %v62 = vsel %vm51, %v40, 0
  %64 = vmatpush.bf16.msra.mxu0 0
  %65 = vmatpush.bf16.msra.mxu0 0
  %66 = vmatpush.bf16.msra.mxu0 0
  %67 = vmatpush.bf16.msra.mxu0 0
  %68 = vmatpush.bf16.msra.mxu0 0
  %69 = vmatpush.bf16.msra.mxu0 0
  %70 = vmatpush.bf16.msra.mxu0 %v46
  %71 = vmatpush.bf16.msra.mxu0 %v45
  %72 = vmatmul.bf16.gmra.mxu0 %v53
  %v73 = vpop.f32.mrf.mxu0
  %v74 = vadd.f32 %v49, %v73
  %v75 = vpop.f32.mrf.mxu0
  %v76 = vadd.f32 %v49, %v75
  %77 = vmatmul.bf16.gmra.mxu0 %v56
  %v78 = vpop.f32.mrf.mxu0
  %v79 = vadd.f32 %v49, %v78
  %v80 = vpop.f32.mrf.mxu0
  %v81 = vadd.f32 %v49, %v80
  %82 = vmatmul.bf16.gmra.mxu0 %v59
  %v83 = vpop.f32.mrf.mxu0
  %v84 = vadd.f32 %v49, %v83
  %v85 = vpop.f32.mrf.mxu0
  %v86 = vadd.f32 %v49, %v85
  %87 = vmatmul.bf16.gmra.mxu0 %v62
  %v88 = vpop.f32.mrf.mxu0
  %v89 = vadd.f32 %v49, %v88
  %v90 = vpop.f32.mrf.mxu0
  %v91 = vadd.f32 %v49, %v90
  %92 = vdwg.mxu0
  %93 = vst.msk [vmem:[%s7] sm:$0xff] %vm51, %v74
  %94 = vst.msk [vmem:[%s7 + $0x8] sm:$0xff] %vm51, %v76
  %95 = vst.msk [vmem:[%s7 + $0x10] sm:$0xff] %vm51, %v79
  %96 = vst.msk [vmem:[%s7 + $0x18] sm:$0xff] %vm51, %v81
  %97 = vst.msk [vmem:[%s7 + $0x20] sm:$0xff] %vm51, %v84
  %98 = vst.msk [vmem:[%s7 + $0x28] sm:$0xff] %vm51, %v86
  %99 = vst.msk [vmem:[%s7 + $0x30] sm:$0xff] %vm51, %v89
  %100 = vst.msk [vmem:[%s7 + $0x38] sm:$0xff] %vm51, %v91
  %v101 = vpack.c.bf16 %v76, %v74
  %v102 = vpack.c.bf16 %v81, %v79
  %v103 = vpack.c.bf16 %v86, %v84
  %v104 = vpack.c.bf16 %v91, %v89
  %v105 = vld [vmem:[%s3] sm:$0xff]
  %v106 = vld [vmem:[%s3 + $0x8] sm:$0xff]
  %v107 = vld [vmem:[%s3 + $0x10] sm:$0xff]
  %v108 = vld [vmem:[%s3 + $0x18] sm:$0xff]
  %v109 = vpack.c.bf16 %v106, %v105
  %v110 = vpack.c.bf16 %v108, %v107
  %v111 = vld [vmem:[%s4] sm:$0x1]
  %v113 = vperm.slane %v111, 0
  %v116 = vsel %vm51, %v101, 0
  %v119 = vsel %vm51, %v102, 0
  %v122 = vsel %vm51, %v103, 0
  %v125 = vsel %vm51, %v104, 0
  %127 = vmatpush.bf16.msra.mxu0 0
  %128 = vmatpush.bf16.msra.mxu0 0
  %129 = vmatpush.bf16.msra.mxu0 0
  %130 = vmatpush.bf16.msra.mxu0 0
  %131 = vmatpush.bf16.msra.mxu0 0
  %132 = vmatpush.bf16.msra.mxu0 0
  %133 = vmatpush.bf16.msra.mxu0 %v110
  %134 = vmatpush.bf16.msra.mxu0 %v109
  %135 = vmatmul.bf16.gmra.mxu0 %v116
  %v136 = vpop.f32.mrf.mxu0
  %v137 = vadd.f32 %v113, %v136
  %v138 = vpop.f32.mrf.mxu0
  %v139 = vadd.f32 %v113, %v138
  %140 = vmatmul.bf16.gmra.mxu0 %v119
  %v141 = vpop.f32.mrf.mxu0
  %v142 = vadd.f32 %v113, %v141
  %v143 = vpop.f32.mrf.mxu0
  %v144 = vadd.f32 %v113, %v143
  %145 = vmatmul.bf16.gmra.mxu0 %v122
  %v146 = vpop.f32.mrf.mxu0
  %v147 = vadd.f32 %v113, %v146
  %v148 = vpop.f32.mrf.mxu0
  %v149 = vadd.f32 %v113, %v148
  %150 = vmatmul.bf16.gmra.mxu0 %v125
  %v151 = vpop.f32.mrf.mxu0
  %v152 = vadd.f32 %v113, %v151
  %v153 = vpop.f32.mrf.mxu0
  %v154 = vadd.f32 %v113, %v153
  %155 = vdwg.mxu0
  %v156 = vmax.f32 %v137, 0.0
  %v157 = vmax.f32 %v139, 0.0
  %v158 = vmax.f32 %v142, 0.0
  %v159 = vmax.f32 %v144, 0.0
  %v160 = vmax.f32 %v147, 0.0
  %v161 = vmax.f32 %v149, 0.0
  %v162 = vmax.f32 %v152, 0.0
  %v163 = vmax.f32 %v154, 0.0
  %v164 = vsel %vm51, %v156, 0.0
  %165 = vadd.xlane.f32.xlu0 %v164
  %v166 = vpop.xlane.xlu0 %165
  %v167 = vsel %vm51, %v157, 0.0
  %168 = vadd.xlane.f32.xlu0 %v167
  %v169 = vpop.xlane.xlu0 %168
  %v170 = vsel %vm51, %v158, 0.0
  %171 = vadd.xlane.f32.xlu0 %v170
  %v172 = vpop.xlane.xlu0 %171
  %v173 = vsel %vm51, %v159, 0.0
  %174 = vadd.xlane.f32.xlu0 %v173
  %v175 = vpop.xlane.xlu0 %174
  %v176 = vsel %vm51, %v160, 0.0
  %177 = vadd.xlane.f32.xlu0 %v176
  %v178 = vpop.xlane.xlu0 %177
  %v179 = vsel %vm51, %v161, 0.0
  %180 = vadd.xlane.f32.xlu0 %v179
  %v181 = vpop.xlane.xlu0 %180
  %v182 = vsel %vm51, %v162, 0.0
  %183 = vadd.xlane.f32.xlu0 %v182
  %v184 = vpop.xlane.xlu0 %183
  %v185 = vsel %vm51, %v163, 0.0
  %186 = vadd.xlane.f32.xlu0 %v185
  %v187 = vpop.xlane.xlu0 %186
  %v188 = vrcp.pop 32.0
  %v189 = vmul.f32 32.0, %v188
  %v190 = vsub.f32 1.0, %v189
  %v191 = vmul.f32 %v188, %v190
  %v192 = vadd.f32 %v188, %v191
  %vm193 = vweird.f32 %v188
  %v194 = vsel %vm193, %v188, %v192
  %v195 = vmul.f32 %v166, %v194
  %v196 = vmul.f32 %v169, %v194
  %v197 = vmul.f32 %v172, %v194
  %v198 = vmul.f32 %v175, %v194
  %v199 = vmul.f32 %v178, %v194
  %v200 = vmul.f32 %v181, %v194
  %v201 = vmul.f32 %v184, %v194
  %v202 = vmul.f32 %v187, %v194
  %v203 = vsub.f32 %v156, %v195
  %v204 = vsub.f32 %v157, %v196
  %v205 = vsub.f32 %v158, %v197
  %v206 = vsub.f32 %v159, %v198
  %v207 = vsub.f32 %v160, %v199
  %v208 = vsub.f32 %v161, %v200
  %v209 = vsub.f32 %v162, %v201
  %v210 = vsub.f32 %v163, %v202
  %v211 = vmul.f32 %v203, %v203
  %v212 = vmul.f32 %v204, %v204
  %v213 = vmul.f32 %v205, %v205
  %v214 = vmul.f32 %v206, %v206
  %v215 = vmul.f32 %v207, %v207
  %v216 = vmul.f32 %v208, %v208
  %v217 = vmul.f32 %v209, %v209
  %v218 = vmul.f32 %v210, %v210
  %v219 = vsel %vm51, %v211, 0.0
  %220 = vadd.xlane.f32.xlu0 %v219
  %v221 = vpop.xlane.xlu0 %220
  %v222 = vsel %vm51, %v212, 0.0
  %223 = vadd.xlane.f32.xlu0 %v222
  %v224 = vpop.xlane.xlu0 %223
  %v225 = vsel %vm51, %v213, 0.0
  %226 = vadd.xlane.f32.xlu0 %v225
  %v227 = vpop.xlane.xlu0 %226
  %v228 = vsel %vm51, %v214, 0.0
  %229 = vadd.xlane.f32.xlu0 %v228
  %v230 = vpop.xlane.xlu0 %229
  %v231 = vsel %vm51, %v215, 0.0
  %232 = vadd.xlane.f32.xlu0 %v231
  %v233 = vpop.xlane.xlu0 %232
  %v234 = vsel %vm51, %v216, 0.0
  %235 = vadd.xlane.f32.xlu0 %v234
  %v236 = vpop.xlane.xlu0 %235
  %v237 = vsel %vm51, %v217, 0.0
  %238 = vadd.xlane.f32.xlu0 %v237
  %v239 = vpop.xlane.xlu0 %238
  %v240 = vsel %vm51, %v218, 0.0
  %241 = vadd.xlane.f32.xlu0 %v240
  %v242 = vpop.xlane.xlu0 %241
  %v243 = vmul.f32 %v221, %v194
  %v244 = vmul.f32 %v224, %v194
  %v245 = vmul.f32 %v227, %v194
  %v246 = vmul.f32 %v230, %v194
  %v247 = vmul.f32 %v233, %v194
  %v248 = vmul.f32 %v236, %v194
  %v249 = vmul.f32 %v239, %v194
  %v250 = vmul.f32 %v242, %v194
  %v251 = vadd.f32 %v243, 1e-05
  %v252 = vadd.f32 %v244, 1e-05
  %v253 = vadd.f32 %v245, 1e-05
  %v254 = vadd.f32 %v246, 1e-05
  %v255 = vadd.f32 %v247, 1e-05
  %v256 = vadd.f32 %v248, 1e-05
  %v257 = vadd.f32 %v249, 1e-05
  %v258 = vadd.f32 %v250, 1e-05
  %v259 = vrsqrt.pop %v251
  %v260 = vmul.f32 %v259, %v251
  %v261 = vmul.f32 %v260, %v259
  %v262 = vmul.f32 0.5, %v261
  %v263 = vsub.f32 1.5, %v262
  %v264 = vmul.f32 %v259, %v263
  %vm265 = vweird.f32 %v251
  %vm266 = vweird.f32 %v259
  %vm267 = vmor %vm265, %vm266
  %v268 = vsel %vm267, %v259, %v264
  %v269 = vrsqrt.pop %v252
  %v270 = vmul.f32 %v269, %v252
  %v271 = vmul.f32 %v270, %v269
  %v272 = vmul.f32 0.5, %v271
  %v273 = vsub.f32 1.5, %v272
  %v274 = vmul.f32 %v269, %v273
  %vm275 = vweird.f32 %v252
  %vm276 = vweird.f32 %v269
  %vm277 = vmor %vm275, %vm276
  %v278 = vsel %vm277, %v269, %v274
  %v279 = vrsqrt.pop %v253
  %v280 = vmul.f32 %v279, %v253
  %v281 = vmul.f32 %v280, %v279
  %v282 = vmul.f32 0.5, %v281
  %v283 = vsub.f32 1.5, %v282
  %v284 = vmul.f32 %v279, %v283
  %vm285 = vweird.f32 %v253
  %vm286 = vweird.f32 %v279
  %vm287 = vmor %vm285, %vm286
  %v288 = vsel %vm287, %v279, %v284
  %v289 = vrsqrt.pop %v254
  %v290 = vmul.f32 %v289, %v254
  %v291 = vmul.f32 %v290, %v289
  %v292 = vmul.f32 0.5, %v291
  %v293 = vsub.f32 1.5, %v292
  %v294 = vmul.f32 %v289, %v293
  %vm295 = vweird.f32 %v254
  %vm296 = vweird.f32 %v289
  %vm297 = vmor %vm295, %vm296
  %v298 = vsel %vm297, %v289, %v294
  %v299 = vrsqrt.pop %v255
  %v300 = vmul.f32 %v299, %v255
  %v301 = vmul.f32 %v300, %v299
  %v302 = vmul.f32 0.5, %v301
  %v303 = vsub.f32 1.5, %v302
  %v304 = vmul.f32 %v299, %v303
  %vm305 = vweird.f32 %v255
  %vm306 = vweird.f32 %v299
  %vm307 = vmor %vm305, %vm306
  %v308 = vsel %vm307, %v299, %v304
  %v309 = vrsqrt.pop %v256
  %v310 = vmul.f32 %v309, %v256
  %v311 = vmul.f32 %v310, %v309
  %v312 = vmul.f32 0.5, %v311
  %v313 = vsub.f32 1.5, %v312
  %v314 = vmul.f32 %v309, %v313
  %vm315 = vweird.f32 %v256
  %vm316 = vweird.f32 %v309
  %vm317 = vmor %vm315, %vm316
  %v318 = vsel %vm317, %v309, %v314
  %v319 = vrsqrt.pop %v257
  %v320 = vmul.f32 %v319, %v257
  %v321 = vmul.f32 %v320, %v319
  %v322 = vmul.f32 0.5, %v321
  %v323 = vsub.f32 1.5, %v322
  %v324 = vmul.f32 %v319, %v323
  %vm325 = vweird.f32 %v257
  %vm326 = vweird.f32 %v319
  %vm327 = vmor %vm325, %vm326
  %v328 = vsel %vm327, %v319, %v324
  %v329 = vrsqrt.pop %v258
  %v330 = vmul.f32 %v329, %v258
  %v331 = vmul.f32 %v330, %v329
  %v332 = vmul.f32 0.5, %v331
  %v333 = vsub.f32 1.5, %v332
  %v334 = vmul.f32 %v329, %v333
  %vm335 = vweird.f32 %v258
  %vm336 = vweird.f32 %v329
  %vm337 = vmor %vm335, %vm336
  %v338 = vsel %vm337, %v329, %v334
  %v339 = vmul.f32 %v203, %v268
  %v340 = vmul.f32 %v204, %v278
  %v341 = vmul.f32 %v205, %v288
  %v342 = vmul.f32 %v206, %v298
  %v343 = vmul.f32 %v207, %v308
  %v344 = vmul.f32 %v208, %v318
  %v345 = vmul.f32 %v209, %v328
  %v346 = vmul.f32 %v210, %v338
  %v347 = vld [vmem:[%s5] sm:$0x1]
  %v349 = vperm.slane %v347, 0
  %v351 = vmul.f32 %v339, %v349
  %v352 = vmul.f32 %v340, %v349
  %v353 = vmul.f32 %v341, %v349
  %v354 = vmul.f32 %v342, %v349
  %v355 = vmul.f32 %v343, %v349
  %v356 = vmul.f32 %v344, %v349
  %v357 = vmul.f32 %v345, %v349
  %v358 = vmul.f32 %v346, %v349
  %v359 = vld [vmem:[%s6] sm:$0x1]
  %v361 = vperm.slane %v359, 0
  %v363 = vadd.f32 %v351, %v361
  %v364 = vadd.f32 %v352, %v361
  %v365 = vadd.f32 %v353, %v361
  %v366 = vadd.f32 %v354, %v361
  %v367 = vadd.f32 %v355, %v361
  %v368 = vadd.f32 %v356, %v361
  %v369 = vadd.f32 %v357, %v361
  %v370 = vadd.f32 %v358, %v361
  %371 = vst.msk [vmem:[%s8] sm:$0xff] %vm51, %v363
  %372 = vst.msk [vmem:[%s8 + $0x8] sm:$0xff] %vm51, %v364
  %373 = vst.msk [vmem:[%s8 + $0x10] sm:$0xff] %vm51, %v365
  %374 = vst.msk [vmem:[%s8 + $0x18] sm:$0xff] %vm51, %v366
  %375 = vst.msk [vmem:[%s8 + $0x20] sm:$0xff] %vm51, %v367
  %376 = vst.msk [vmem:[%s8 + $0x28] sm:$0xff] %vm51, %v368
  %377 = vst.msk [vmem:[%s8 + $0x30] sm:$0xff] %vm51, %v369
  %378 = vst.msk [vmem:[%s8 + $0x38] sm:$0xff] %vm51, %v370
  // Predicated region
  $region30: #{gnn_conv_forward.8} parent=0 // pred_check
    _
  $region31: #{gnn_conv_forward.8} parent=0 // pred_check_branch
    %380 = sbr.rel (0) target = $region33
  $region32: #{gnn_conv_forward.8} parent=0 // pred_region
    _
  $region33: #{gnn_conv_forward.8} parent=0 // pred_fallthru
    _
  // Predicated region
  $region34: #{gnn_conv_forward.8} parent=0 // pred_check
    _
  $region35: #{gnn_conv_forward.8} parent=0 // pred_check_branch
    %382 = sbr.rel (0) target = $region37
  $region36: #{gnn_conv_forward.8} parent=0 // pred_region
    _
  $region37: #{gnn_conv_forward.8} parent=0 // pred_fallthru
    _
  // Predicated region
  $region38: #{gnn_conv_forward.8} parent=0 // pred_check
    _
  $region39: #{gnn_conv_forward.8} parent=0 // pred_check_branch
    %384 = sbr.rel (0) target = $region41
  $region40: #{gnn_conv_forward.8} parent=0 // pred_region
    _
  $region41: #{gnn_conv_forward.8} parent=0 // pred_fallthru
    _
  // Predicated region
  $region42: #{gnn_conv_forward.8} parent=0 // pred_check
    _
  $region43: #{gnn_conv_forward.8} parent=0 // pred_check_branch
    %386 = sbr.rel (0) target = $region45
  $region44: #{gnn_conv_forward.8} parent=0 // pred_region
    _
  $region45: #{gnn_conv_forward.8} parent=0 // pred_fallthru
    _

// kernel: gnn_conv_forward.9
$region0: #{gnn_conv_forward.9}
  #allocation0 [shape = 'u32[]', space=smem, size = 0x4, offset = 0x4, fixed_abs, tag = 'smem constant byte address 0x4 - core index']
  #allocation1 [shape = 'u32[72,128]{1,0:T(1,128)}', space=vmem, size = 0x9000, scoped, tag = 'internal scratch']
  %s0 = inlined_call_operand.vmem [shape: f32[128,32], index: 0, kind: input, shape index: {}]
  %s1 = inlined_call_operand.vmem [shape: s32[128,1], index: 1, kind: input, shape index: {}]
  %s2 = inlined_call_operand.vmem [shape: f32[96,32], index: 2, kind: input, shape index: {}]
  %s3 = inlined_call_operand.vmem [shape: f32[128,32], index: 3, kind: output, shape index: {}]
  %s4 = sld [smem:[#allocation0]]
  $region22: #{gnn_conv_forward.9} parent=0
    _
  %s6 = ssub.s32 1, %s4
  %s7 = scalar_select 0, %s6, %s4
  // Predicated region
  $region2: #{gnn_conv_forward.9} parent=0 // pred_check
    _
  $region3: #{gnn_conv_forward.9} parent=0 // pred_check_branch
    %9 = sbr.rel (0) target = $region5
  $region4: #{gnn_conv_forward.9} parent=0 // pred_region
    _
  $region5: #{gnn_conv_forward.9} parent=0 // pred_fallthru
    _
  // Predicated region
  $region6: #{gnn_conv_forward.9} parent=0 // pred_check
    _
  $region7: #{gnn_conv_forward.9} parent=0 // pred_check_branch
    %11 = sbr.rel (0) target = $region9
  $region8: #{gnn_conv_forward.9} parent=0 // pred_region
    _
  $region9: #{gnn_conv_forward.9} parent=0 // pred_fallthru
    _
  // Predicated region
  $region10: #{gnn_conv_forward.9} parent=0 // pred_check
    _
  $region11: #{gnn_conv_forward.9} parent=0 // pred_check_branch
    %13 = sbr.rel (0) target = $region13
  $region12: #{gnn_conv_forward.9} parent=0 // pred_region
    _
  $region13: #{gnn_conv_forward.9} parent=0 // pred_fallthru
    _
  %v15 = vld [vmem:[%s0] sm:$0xff]
  %v16 = vld [vmem:[%s0 + $0x8] sm:$0xff]
  %v17 = vld [vmem:[%s0 + $0x10] sm:$0xff]
  %v18 = vld [vmem:[%s0 + $0x18] sm:$0xff]
  %v19 = vld [vmem:[%s0 + $0x20] sm:$0xff]
  %v20 = vld [vmem:[%s0 + $0x28] sm:$0xff]
  %v21 = vld [vmem:[%s0 + $0x30] sm:$0xff]
  %v22 = vld [vmem:[%s0 + $0x38] sm:$0xff]
  %v23 = vld [vmem:[%s0 + $0x40] sm:$0xff]
  %v24 = vld [vmem:[%s0 + $0x48] sm:$0xff]
  %v25 = vld [vmem:[%s0 + $0x50] sm:$0xff]
  %v26 = vld [vmem:[%s0 + $0x58] sm:$0xff]
  %v27 = vld [vmem:[%s0 + $0x60] sm:$0xff]
  %v28 = vld [vmem:[%s0 + $0x68] sm:$0xff]
  %v29 = vld [vmem:[%s0 + $0x70] sm:$0xff]
  %v30 = vld [vmem:[%s0 + $0x78] sm:$0xff]
  %v31 = vpack.c.bf16 %v16, %v15
  %v32 = vpack.c.bf16 %v18, %v17
  %v33 = vpack.c.bf16 %v20, %v19
  %v34 = vpack.c.bf16 %v22, %v21
  %v35 = vpack.c.bf16 %v24, %v23
  %v36 = vpack.c.bf16 %v26, %v25
  %v37 = vpack.c.bf16 %v28, %v27
  %v38 = vpack.c.bf16 %v30, %v29
  %v39 = vld [vmem:[%s1] sm:$0xff]
  %v40 = vld [vmem:[%s1 + $0x8] sm:$0xff]
  %v41 = vld [vmem:[%s1 + $0x10] sm:$0xff]
  %v42 = vld [vmem:[%s1 + $0x18] sm:$0xff]
  %v43 = vld [vmem:[%s1 + $0x20] sm:$0xff]
  %v44 = vld [vmem:[%s1 + $0x28] sm:$0xff]
  %v45 = vld [vmem:[%s1 + $0x30] sm:$0xff]
  %v46 = vld [vmem:[%s1 + $0x38] sm:$0xff]
  %v47 = vld [vmem:[%s1 + $0x40] sm:$0xff]
  %v48 = vld [vmem:[%s1 + $0x48] sm:$0xff]
  %v49 = vld [vmem:[%s1 + $0x50] sm:$0xff]
  %v50 = vld [vmem:[%s1 + $0x58] sm:$0xff]
  %v51 = vld [vmem:[%s1 + $0x60] sm:$0xff]
  %v52 = vld [vmem:[%s1 + $0x68] sm:$0xff]
  %v53 = vld [vmem:[%s1 + $0x70] sm:$0xff]
  %v54 = vld [vmem:[%s1 + $0x78] sm:$0xff]
  %v55 = vld [vmem:[%s2] sm:$0xff]
  %v56 = vld [vmem:[%s2 + $0x8] sm:$0xff]
  %v57 = vld [vmem:[%s2 + $0x10] sm:$0xff]
  %v58 = vld [vmem:[%s2 + $0x18] sm:$0xff]
  %v59 = vpack.c.bf16 %v56, %v55
  %v60 = vpack.c.bf16 %v58, %v57
  %vm61 = vcmask 261120
  %v63 = vsel %vm61, %v31, 0
  %v66 = vsel %vm61, %v32, 0
  %v69 = vsel %vm61, %v33, 0
  %v72 = vsel %vm61, %v34, 0
  %v75 = vsel %vm61, %v35, 0
  %v78 = vsel %vm61, %v36, 0
  %v81 = vsel %vm61, %v37, 0
  %v84 = vsel %vm61, %v38, 0
  %86 = vmatpush.bf16.msra.mxu0 0
  %87 = vmatpush.bf16.msra.mxu0 0
  %88 = vmatpush.bf16.msra.mxu0 0
  %89 = vmatpush.bf16.msra.mxu0 0
  %90 = vmatpush.bf16.msra.mxu0 0
  %91 = vmatpush.bf16.msra.mxu0 0
  %92 = vmatpush.bf16.msra.mxu0 %v60
  %93 = vmatpush.bf16.msra.mxu0 %v59
  %94 = vmatmul.bf16.gmra.mxu0 %v63
  %v95 = vpop.f32.mrf.mxu0
  %v96 = vadd.f32 0.0, %v95
  %v97 = vpop.f32.mrf.mxu0
  %v98 = vadd.f32 0.0, %v97
  %99 = vmatmul.bf16.gmra.mxu0 %v66
  %v100 = vpop.f32.mrf.mxu0
  %v101 = vadd.f32 0.0, %v100
  %v102 = vpop.f32.mrf.mxu0
  %v103 = vadd.f32 0.0, %v102
  %104 = vmatmul.bf16.gmra.mxu0 %v69
  %v105 = vpop.f32.mrf.mxu0
  %v106 = vadd.f32 0.0, %v105
  %v107 = vpop.f32.mrf.mxu0
  %v108 = vadd.f32 0.0, %v107
  %109 = vmatmul.bf16.gmra.mxu0 %v72
  %v110 = vpop.f32.mrf.mxu0
  %v111 = vadd.f32 0.0, %v110
  %v112 = vpop.f32.mrf.mxu0
  %v113 = vadd.f32 0.0, %v112
  %114 = vmatmul.bf16.gmra.mxu0 %v75
  %v115 = vpop.f32.mrf.mxu0
  %v116 = vadd.f32 0.0, %v115
  %v117 = vpop.f32.mrf.mxu0
  %v118 = vadd.f32 0.0, %v117
  %119 = vmatmul.bf16.gmra.mxu0 %v78
  %v120 = vpop.f32.mrf.mxu0
  %v121 = vadd.f32 0.0, %v120
  %v122 = vpop.f32.mrf.mxu0
  %v123 = vadd.f32 0.0, %v122
  %124 = vmatmul.bf16.gmra.mxu0 %v81
  %v125 = vpop.f32.mrf.mxu0
  %v126 = vadd.f32 0.0, %v125
  %v127 = vpop.f32.mrf.mxu0
  %v128 = vadd.f32 0.0, %v127
  %129 = vmatmul.bf16.gmra.mxu0 %v84
  %v130 = vpop.f32.mrf.mxu0
  %v131 = vadd.f32 0.0, %v130
  %v132 = vpop.f32.mrf.mxu0
  %v133 = vadd.f32 0.0, %v132
  %134 = vdwg.mxu0
  %vm135 = vcmp.eq.s32.totalorder %v39, 0
  %vm136 = vcmp.eq.s32.totalorder %v40, 0
  %vm137 = vcmp.eq.s32.totalorder %v41, 0
  %vm138 = vcmp.eq.s32.totalorder %v42, 0
  %vm139 = vcmp.eq.s32.totalorder %v43, 0
  %vm140 = vcmp.eq.s32.totalorder %v44, 0
  %vm141 = vcmp.eq.s32.totalorder %v45, 0
  %vm142 = vcmp.eq.s32.totalorder %v46, 0
  %vm143 = vcmp.eq.s32.totalorder %v47, 0
  %vm144 = vcmp.eq.s32.totalorder %v48, 0
  %vm145 = vcmp.eq.s32.totalorder %v49, 0
  %vm146 = vcmp.eq.s32.totalorder %v50, 0
  %vm147 = vcmp.eq.s32.totalorder %v51, 0
  %vm148 = vcmp.eq.s32.totalorder %v52, 0
  %vm149 = vcmp.eq.s32.totalorder %v53, 0
  %vm150 = vcmp.eq.s32.totalorder %v54, 0
  %v151 = vsel %vm135, 1, 0
  %v152 = vsel %vm136, 1, 0
  %v153 = vsel %vm137, 1, 0
  %v154 = vsel %vm138, 1, 0
  %v155 = vsel %vm139, 1, 0
  %v156 = vsel %vm140, 1, 0
  %v157 = vsel %vm141, 1, 0
  %v158 = vsel %vm142, 1, 0
  %v159 = vsel %vm143, 1, 0
  %v160 = vsel %vm144, 1, 0
  %v161 = vsel %vm145, 1, 0
  %v162 = vsel %vm146, 1, 0
  %v163 = vsel %vm147, 1, 0
  %v164 = vsel %vm148, 1, 0
  %v165 = vsel %vm149, 1, 0
  %v166 = vsel %vm150, 1, 0
  %v167 = vcvt.s32.f32 %v151
  %v168 = vcvt.s32.f32 %v152
  %v169 = vcvt.s32.f32 %v153
  %v170 = vcvt.s32.f32 %v154
  %v171 = vcvt.s32.f32 %v155
  %v172 = vcvt.s32.f32 %v156
  %v173 = vcvt.s32.f32 %v157
  %v174 = vcvt.s32.f32 %v158
  %v175 = vcvt.s32.f32 %v159
  %v176 = vcvt.s32.f32 %v160
  %v177 = vcvt.s32.f32 %v161
  %v178 = vcvt.s32.f32 %v162
  %v179 = vcvt.s32.f32 %v163
  %v180 = vcvt.s32.f32 %v164
  %v181 = vcvt.s32.f32 %v165
  %v182 = vcvt.s32.f32 %v166
  %184 = vset.pattern.permute.xlu0 0
  %185 = vperm.xlu0 %184, %v167
  %v186 = vpop.permute.xlu0 %185
  %189 = vset.pattern.permute.xlu0 0
  %190 = vperm.xlu0 %189, %v168
  %v191 = vpop.permute.xlu0 %190
  %194 = vset.pattern.permute.xlu0 0
  %195 = vperm.xlu0 %194, %v169
  %v196 = vpop.permute.xlu0 %195
  %199 = vset.pattern.permute.xlu0 0
  %200 = vperm.xlu0 %199, %v170
  %v201 = vpop.permute.xlu0 %200
  %204 = vset.pattern.permute.xlu0 0
  %205 = vperm.xlu0 %204, %v171
  %v206 = vpop.permute.xlu0 %205
  %209 = vset.pattern.permute.xlu0 0
  %210 = vperm.xlu0 %209, %v172
  %v211 = vpop.permute.xlu0 %210
  %214 = vset.pattern.permute.xlu0 0
  %215 = vperm.xlu0 %214, %v173
  %v216 = vpop.permute.xlu0 %215
  %219 = vset.pattern.permute.xlu0 0
  %220 = vperm.xlu0 %219, %v174
  %v221 = vpop.permute.xlu0 %220
  %224 = vset.pattern.permute.xlu0 0
  %225 = vperm.xlu0 %224, %v175
  %v226 = vpop.permute.xlu0 %225
  %229 = vset.pattern.permute.xlu0 0
  %230 = vperm.xlu0 %229, %v176
  %v231 = vpop.permute.xlu0 %230
  %234 = vset.pattern.permute.xlu0 0
  %235 = vperm.xlu0 %234, %v177
  %v236 = vpop.permute.xlu0 %235
  %239 = vset.pattern.permute.xlu0 0
  %240 = vperm.xlu0 %239, %v178
  %v241 = vpop.permute.xlu0 %240
  %244 = vset.pattern.permute.xlu0 0
  %245 = vperm.xlu0 %244, %v179
  %v246 = vpop.permute.xlu0 %245
  %249 = vset.pattern.permute.xlu0 0
  %250 = vperm.xlu0 %249, %v180
  %v251 = vpop.permute.xlu0 %250
  %254 = vset.pattern.permute.xlu0 0
  %255 = vperm.xlu0 %254, %v181
  %v256 = vpop.permute.xlu0 %255
  %259 = vset.pattern.permute.xlu0 0
  %260 = vperm.xlu0 %259, %v182
  %v261 = vpop.permute.xlu0 %260
  %v263 = vmul.f32 %v96, %v186
  %v264 = vmul.f32 %v98, %v191
  %v265 = vmul.f32 %v101, %v196
  %v266 = vmul.f32 %v103, %v201
  %v267 = vmul.f32 %v106, %v206
  %v268 = vmul.f32 %v108, %v211
  %v269 = vmul.f32 %v111, %v216
  %v270 = vmul.f32 %v113, %v221
  %v271 = vmul.f32 %v116, %v226
  %v272 = vmul.f32 %v118, %v231
  %v273 = vmul.f32 %v121, %v236
  %v274 = vmul.f32 %v123, %v241
  %v275 = vmul.f32 %v126, %v246
  %v276 = vmul.f32 %v128, %v251
  %v277 = vmul.f32 %v131, %v256
  %v278 = vmul.f32 %v133, %v261
  %v279 = vadd.f32 %v263, 0.0
  %v280 = vadd.f32 %v264, 0.0
  %v281 = vadd.f32 %v265, 0.0
  %v282 = vadd.f32 %v266, 0.0
  %v283 = vadd.f32 %v267, 0.0
  %v284 = vadd.f32 %v268, 0.0
  %v285 = vadd.f32 %v269, 0.0
  %v286 = vadd.f32 %v270, 0.0
  %v287 = vadd.f32 %v271, 0.0
  %v288 = vadd.f32 %v272, 0.0
  %v289 = vadd.f32 %v273, 0.0
  %v290 = vadd.f32 %v274, 0.0
  %v291 = vadd.f32 %v275, 0.0
  %v292 = vadd.f32 %v276, 0.0
  %v293 = vadd.f32 %v277, 0.0
  %v294 = vadd.f32 %v278, 0.0
  %v295 = vld [vmem:[%s2 + $0x20] sm:$0xff]
  %v296 = vld [vmem:[%s2 + $0x28] sm:$0xff]
  %v297 = vld [vmem:[%s2 + $0x30] sm:$0xff]
  %v298 = vld [vmem:[%s2 + $0x38] sm:$0xff]
  %v299 = vpack.c.bf16 %v296, %v295
  %v300 = vpack.c.bf16 %v298, %v297
  %301 = vmatpush.bf16.msra.mxu0 0
  %302 = vmatpush.bf16.msra.mxu0 0
  %303 = vmatpush.bf16.msra.mxu0 0
  %304 = vmatpush.bf16.msra.mxu0 0
  %305 = vmatpush.bf16.msra.mxu0 0
  %306 = vmatpush.bf16.msra.mxu0 0
  %307 = vmatpush.bf16.msra.mxu0 %v300
  %308 = vmatpush.bf16.msra.mxu0 %v299
  %309 = vmatmul.bf16.gmra.mxu0 %v63
  %v310 = vpop.f32.mrf.mxu0
  %v311 = vadd.f32 0.0, %v310
  %v312 = vpop.f32.mrf.mxu0
  %v313 = vadd.f32 0.0, %v312
  %314 = vmatmul.bf16.gmra.mxu0 %v66
  %v315 = vpop.f32.mrf.mxu0
  %v316 = vadd.f32 0.0, %v315
  %v317 = vpop.f32.mrf.mxu0
  %v318 = vadd.f32 0.0, %v317
  %319 = vmatmul.bf16.gmra.mxu0 %v69
  %v320 = vpop.f32.mrf.mxu0
  %v321 = vadd.f32 0.0, %v320
  %v322 = vpop.f32.mrf.mxu0
  %v323 = vadd.f32 0.0, %v322
  %324 = vmatmul.bf16.gmra.mxu0 %v72
  %v325 = vpop.f32.mrf.mxu0
  %v326 = vadd.f32 0.0, %v325
  %v327 = vpop.f32.mrf.mxu0
  %v328 = vadd.f32 0.0, %v327
  %329 = vmatmul.bf16.gmra.mxu0 %v75
  %v330 = vpop.f32.mrf.mxu0
  %v331 = vadd.f32 0.0, %v330
  %v332 = vpop.f32.mrf.mxu0
  %v333 = vadd.f32 0.0, %v332
  %334 = vmatmul.bf16.gmra.mxu0 %v78
  %v335 = vpop.f32.mrf.mxu0
  %v336 = vadd.f32 0.0, %v335
  %v337 = vpop.f32.mrf.mxu0
  %v338 = vadd.f32 0.0, %v337
  %339 = vmatmul.bf16.gmra.mxu0 %v81
  %v340 = vpop.f32.mrf.mxu0
  %v341 = vadd.f32 0.0, %v340
  %v342 = vpop.f32.mrf.mxu0
  %v343 = vadd.f32 0.0, %v342
  %344 = vmatmul.bf16.gmra.mxu0 %v84
  %v345 = vpop.f32.mrf.mxu0
  %v346 = vadd.f32 0.0, %v345
  %v347 = vpop.f32.mrf.mxu0
  %v348 = vadd.f32 0.0, %v347
  %349 = vdwg.mxu0
  %vm350 = vcmp.eq.s32.totalorder %v39, 1
  %vm351 = vcmp.eq.s32.totalorder %v40, 1
  %vm352 = vcmp.eq.s32.totalorder %v41, 1
  %vm353 = vcmp.eq.s32.totalorder %v42, 1
  %vm354 = vcmp.eq.s32.totalorder %v43, 1
  %vm355 = vcmp.eq.s32.totalorder %v44, 1
  %vm356 = vcmp.eq.s32.totalorder %v45, 1
  %vm357 = vcmp.eq.s32.totalorder %v46, 1
  %vm358 = vcmp.eq.s32.totalorder %v47, 1
  %vm359 = vcmp.eq.s32.totalorder %v48, 1
  %vm360 = vcmp.eq.s32.totalorder %v49, 1
  %vm361 = vcmp.eq.s32.totalorder %v50, 1
  %vm362 = vcmp.eq.s32.totalorder %v51, 1
  %vm363 = vcmp.eq.s32.totalorder %v52, 1
  %vm364 = vcmp.eq.s32.totalorder %v53, 1
  %vm365 = vcmp.eq.s32.totalorder %v54, 1
  %v366 = vsel %vm350, 1, 0
  %v367 = vsel %vm351, 1, 0
  %v368 = vsel %vm352, 1, 0
  %v369 = vsel %vm353, 1, 0
  %v370 = vsel %vm354, 1, 0
  %v371 = vsel %vm355, 1, 0
  %v372 = vsel %vm356, 1, 0
  %v373 = vsel %vm357, 1, 0
  %v374 = vsel %vm358, 1, 0
  %v375 = vsel %vm359, 1, 0
  %v376 = vsel %vm360, 1, 0
  %v377 = vsel %vm361, 1, 0
  %v378 = vsel %vm362, 1, 0
  %v379 = vsel %vm363, 1, 0
  %v380 = vsel %vm364, 1, 0
  %v381 = vsel %vm365, 1, 0
  %v382 = vcvt.s32.f32 %v366
  %v383 = vcvt.s32.f32 %v367
  %v384 = vcvt.s32.f32 %v368
  %v385 = vcvt.s32.f32 %v369
  %v386 = vcvt.s32.f32 %v370
  %v387 = vcvt.s32.f32 %v371
  %v388 = vcvt.s32.f32 %v372
  %v389 = vcvt.s32.f32 %v373
  %v390 = vcvt.s32.f32 %v374
  %v391 = vcvt.s32.f32 %v375
  %v392 = vcvt.s32.f32 %v376
  %v393 = vcvt.s32.f32 %v377
  %v394 = vcvt.s32.f32 %v378
  %v395 = vcvt.s32.f32 %v379
  %v396 = vcvt.s32.f32 %v380
  %v397 = vcvt.s32.f32 %v381
  %399 = vset.pattern.permute.xlu0 0
  %400 = vperm.xlu0 %399, %v382
  %v401 = vpop.permute.xlu0 %400
  %404 = vset.pattern.permute.xlu0 0
  %405 = vperm.xlu0 %404, %v383
  %v406 = vpop.permute.xlu0 %405
  %409 = vset.pattern.permute.xlu0 0
  %410 = vperm.xlu0 %409, %v384
  %v411 = vpop.permute.xlu0 %410
  %414 = vset.pattern.permute.xlu0 0
  %415 = vperm.xlu0 %414, %v385
  %v416 = vpop.permute.xlu0 %415
  %419 = vset.pattern.permute.xlu0 0
  %420 = vperm.xlu0 %419, %v386
  %v421 = vpop.permute.xlu0 %420
  %424 = vset.pattern.permute.xlu0 0
  %425 = vperm.xlu0 %424, %v387
  %v426 = vpop.permute.xlu0 %425
  %429 = vset.pattern.permute.xlu0 0
  %430 = vperm.xlu0 %429, %v388
  %v431 = vpop.permute.xlu0 %430
  %434 = vset.pattern.permute.xlu0 0
  %435 = vperm.xlu0 %434, %v389
  %v436 = vpop.permute.xlu0 %435
  %439 = vset.pattern.permute.xlu0 0
  %440 = vperm.xlu0 %439, %v390
  %v441 = vpop.permute.xlu0 %440
  %444 = vset.pattern.permute.xlu0 0
  %445 = vperm.xlu0 %444, %v391
  %v446 = vpop.permute.xlu0 %445
  %449 = vset.pattern.permute.xlu0 0
  %450 = vperm.xlu0 %449, %v392
  %v451 = vpop.permute.xlu0 %450
  %454 = vset.pattern.permute.xlu0 0
  %455 = vperm.xlu0 %454, %v393
  %v456 = vpop.permute.xlu0 %455
  %459 = vset.pattern.permute.xlu0 0
  %460 = vperm.xlu0 %459, %v394
  %v461 = vpop.permute.xlu0 %460
  %464 = vset.pattern.permute.xlu0 0
  %465 = vperm.xlu0 %464, %v395
  %v466 = vpop.permute.xlu0 %465
  %469 = vset.pattern.permute.xlu0 0
  %470 = vperm.xlu0 %469, %v396
  %v471 = vpop.permute.xlu0 %470
  %474 = vset.pattern.permute.xlu0 0
  %475 = vperm.xlu0 %474, %v397
  %v476 = vpop.permute.xlu0 %475
  %v478 = vmul.f32 %v311, %v401
  %v479 = vmul.f32 %v313, %v406
  %v480 = vmul.f32 %v316, %v411
  %v481 = vmul.f32 %v318, %v416
  %v482 = vmul.f32 %v321, %v421
  %v483 = vmul.f32 %v323, %v426
  %v484 = vmul.f32 %v326, %v431
  %v485 = vmul.f32 %v328, %v436
  %v486 = vmul.f32 %v331, %v441
  %v487 = vmul.f32 %v333, %v446
  %v488 = vmul.f32 %v336, %v451
  %v489 = vmul.f32 %v338, %v456
  %v490 = vmul.f32 %v341, %v461
  %v491 = vmul.f32 %v343, %v466
  %v492 = vmul.f32 %v346, %v471
  %v493 = vmul.f32 %v348, %v476
  %v494 = vadd.f32 %v279, %v478
  %v495 = vadd.f32 %v280, %v479
  %v496 = vadd.f32 %v281, %v480
  %v497 = vadd.f32 %v282, %v481
  %v498 = vadd.f32 %v283, %v482
  %v499 = vadd.f32 %v284, %v483
  %v500 = vadd.f32 %v285, %v484
  %v501 = vadd.f32 %v286, %v485
  %v502 = vadd.f32 %v287, %v486
  %v503 = vadd.f32 %v288, %v487
  %v504 = vadd.f32 %v289, %v488
  %v505 = vadd.f32 %v290, %v489
  %v506 = vadd.f32 %v291, %v490
  %v507 = vadd.f32 %v292, %v491
  %v508 = vadd.f32 %v293, %v492
  %v509 = vadd.f32 %v294, %v493
  %v510 = vld [vmem:[%s2 + $0x40] sm:$0xff]
  %v511 = vld [vmem:[%s2 + $0x48] sm:$0xff]
  %v512 = vld [vmem:[%s2 + $0x50] sm:$0xff]
  %v513 = vld [vmem:[%s2 + $0x58] sm:$0xff]
  %v514 = vpack.c.bf16 %v511, %v510
  %v515 = vpack.c.bf16 %v513, %v512
  %516 = vmatpush.bf16.msra.mxu0 0
  %517 = vmatpush.bf16.msra.mxu0 0
  %518 = vmatpush.bf16.msra.mxu0 0
  %519 = vmatpush.bf16.msra.mxu0 0
  %520 = vmatpush.bf16.msra.mxu0 0
  %521 = vmatpush.bf16.msra.mxu0 0
  %522 = vmatpush.bf16.msra.mxu0 %v515
  %523 = vmatpush.bf16.msra.mxu0 %v514
  %524 = vmatmul.bf16.gmra.mxu0 %v63
  %v525 = vpop.f32.mrf.mxu0
  %v526 = vadd.f32 0.0, %v525
  %v527 = vpop.f32.mrf.mxu0
  %v528 = vadd.f32 0.0, %v527
  %529 = vmatmul.bf16.gmra.mxu0 %v66
  %v530 = vpop.f32.mrf.mxu0
  %v531 = vadd.f32 0.0, %v530
  %v532 = vpop.f32.mrf.mxu0
  %v533 = vadd.f32 0.0, %v532
  %534 = vmatmul.bf16.gmra.mxu0 %v69
  %v535 = vpop.f32.mrf.mxu0
  %v536 = vadd.f32 0.0, %v535
  %v537 = vpop.f32.mrf.mxu0
  %v538 = vadd.f32 0.0, %v537
  %539 = vmatmul.bf16.gmra.mxu0 %v72
  %v540 = vpop.f32.mrf.mxu0
  %v541 = vadd.f32 0.0, %v540
  %v542 = vpop.f32.mrf.mxu0
  %v543 = vadd.f32 0.0, %v542
  %544 = vmatmul.bf16.gmra.mxu0 %v75
  %v545 = vpop.f32.mrf.mxu0
  %v546 = vadd.f32 0.0, %v545
  %v547 = vpop.f32.mrf.mxu0
  %v548 = vadd.f32 0.0, %v547
  %549 = vmatmul.bf16.gmra.mxu0 %v78
  %v550 = vpop.f32.mrf.mxu0
  %v551 = vadd.f32 0.0, %v550
  %v552 = vpop.f32.mrf.mxu0
  %v553 = vadd.f32 0.0, %v552
  %554 = vmatmul.bf16.gmra.mxu0 %v81
  %v555 = vpop.f32.mrf.mxu0
  %v556 = vadd.f32 0.0, %v555
  %v557 = vpop.f32.mrf.mxu0
  %v558 = vadd.f32 0.0, %v557
  %559 = vmatmul.bf16.gmra.mxu0 %v84
  %v560 = vpop.f32.mrf.mxu0
  %v561 = vadd.f32 0.0, %v560
  %v562 = vpop.f32.mrf.mxu0
  %v563 = vadd.f32 0.0, %v562
  %564 = vdwg.mxu0
  %vm565 = vcmp.eq.s32.totalorder %v39, 2
  %vm566 = vcmp.eq.s32.totalorder %v40, 2
  %vm567 = vcmp.eq.s32.totalorder %v41, 2
  %vm568 = vcmp.eq.s32.totalorder %v42, 2
  %vm569 = vcmp.eq.s32.totalorder %v43, 2
  %vm570 = vcmp.eq.s32.totalorder %v44, 2
  %vm571 = vcmp.eq.s32.totalorder %v45, 2
  %vm572 = vcmp.eq.s32.totalorder %v46, 2
  %vm573 = vcmp.eq.s32.totalorder %v47, 2
  %vm574 = vcmp.eq.s32.totalorder %v48, 2
  %vm575 = vcmp.eq.s32.totalorder %v49, 2
  %vm576 = vcmp.eq.s32.totalorder %v50, 2
  %vm577 = vcmp.eq.s32.totalorder %v51, 2
  %vm578 = vcmp.eq.s32.totalorder %v52, 2
  %vm579 = vcmp.eq.s32.totalorder %v53, 2
  %vm580 = vcmp.eq.s32.totalorder %v54, 2
  %v581 = vsel %vm565, 1, 0
  %v582 = vsel %vm566, 1, 0
  %v583 = vsel %vm567, 1, 0
  %v584 = vsel %vm568, 1, 0
  %v585 = vsel %vm569, 1, 0
  %v586 = vsel %vm570, 1, 0
  %v587 = vsel %vm571, 1, 0
  %v588 = vsel %vm572, 1, 0
  %v589 = vsel %vm573, 1, 0
  %v590 = vsel %vm574, 1, 0
  %v591 = vsel %vm575, 1, 0
  %v592 = vsel %vm576, 1, 0
  %v593 = vsel %vm577, 1, 0
  %v594 = vsel %vm578, 1, 0
  %v595 = vsel %vm579, 1, 0
  %v596 = vsel %vm580, 1, 0
  %v597 = vcvt.s32.f32 %v581
  %v598 = vcvt.s32.f32 %v582
  %v599 = vcvt.s32.f32 %v583
  %v600 = vcvt.s32.f32 %v584
  %v601 = vcvt.s32.f32 %v585
  %v602 = vcvt.s32.f32 %v586
  %v603 = vcvt.s32.f32 %v587
  %v604 = vcvt.s32.f32 %v588
  %v605 = vcvt.s32.f32 %v589
  %v606 = vcvt.s32.f32 %v590
  %v607 = vcvt.s32.f32 %v591
  %v608 = vcvt.s32.f32 %v592
  %v609 = vcvt.s32.f32 %v593
  %v610 = vcvt.s32.f32 %v594
  %v611 = vcvt.s32.f32 %v595
  %v612 = vcvt.s32.f32 %v596
  %614 = vset.pattern.permute.xlu0 0
  %615 = vperm.xlu0 %614, %v597
  %v616 = vpop.permute.xlu0 %615
  %619 = vset.pattern.permute.xlu0 0
  %620 = vperm.xlu0 %619, %v598
  %v621 = vpop.permute.xlu0 %620
  %624 = vset.pattern.permute.xlu0 0
  %625 = vperm.xlu0 %624, %v599
  %v626 = vpop.permute.xlu0 %625
  %629 = vset.pattern.permute.xlu0 0
  %630 = vperm.xlu0 %629, %v600
  %v631 = vpop.permute.xlu0 %630
  %634 = vset.pattern.permute.xlu0 0
  %635 = vperm.xlu0 %634, %v601
  %v636 = vpop.permute.xlu0 %635
  %639 = vset.pattern.permute.xlu0 0
  %640 = vperm.xlu0 %639, %v602
  %v641 = vpop.permute.xlu0 %640
  %644 = vset.pattern.permute.xlu0 0
  %645 = vperm.xlu0 %644, %v603
  %v646 = vpop.permute.xlu0 %645
  %649 = vset.pattern.permute.xlu0 0
  %650 = vperm.xlu0 %649, %v604
  %v651 = vpop.permute.xlu0 %650
  %654 = vset.pattern.permute.xlu0 0
  %655 = vperm.xlu0 %654, %v605
  %v656 = vpop.permute.xlu0 %655
  %659 = vset.pattern.permute.xlu0 0
  %660 = vperm.xlu0 %659, %v606
  %v661 = vpop.permute.xlu0 %660
  %664 = vset.pattern.permute.xlu0 0
  %665 = vperm.xlu0 %664, %v607
  %v666 = vpop.permute.xlu0 %665
  %669 = vset.pattern.permute.xlu0 0
  %670 = vperm.xlu0 %669, %v608
  %v671 = vpop.permute.xlu0 %670
  %674 = vset.pattern.permute.xlu0 0
  %675 = vperm.xlu0 %674, %v609
  %v676 = vpop.permute.xlu0 %675
  %679 = vset.pattern.permute.xlu0 0
  %680 = vperm.xlu0 %679, %v610
  %v681 = vpop.permute.xlu0 %680
  %684 = vset.pattern.permute.xlu0 0
  %685 = vperm.xlu0 %684, %v611
  %v686 = vpop.permute.xlu0 %685
  %689 = vset.pattern.permute.xlu0 0
  %690 = vperm.xlu0 %689, %v612
  %v691 = vpop.permute.xlu0 %690
  %v693 = vmul.f32 %v526, %v616
  %v694 = vmul.f32 %v528, %v621
  %v695 = vmul.f32 %v531, %v626
  %v696 = vmul.f32 %v533, %v631
  %v697 = vmul.f32 %v536, %v636
  %v698 = vmul.f32 %v538, %v641
  %v699 = vmul.f32 %v541, %v646
  %v700 = vmul.f32 %v543, %v651
  %v701 = vmul.f32 %v546, %v656
  %v702 = vmul.f32 %v548, %v661
  %v703 = vmul.f32 %v551, %v666
  %v704 = vmul.f32 %v553, %v671
  %v705 = vmul.f32 %v556, %v676
  %v706 = vmul.f32 %v558, %v681
  %v707 = vmul.f32 %v561, %v686
  %v708 = vmul.f32 %v563, %v691
  %v709 = vadd.f32 %v494, %v693
  %v710 = vadd.f32 %v495, %v694
  %v711 = vadd.f32 %v496, %v695
  %v712 = vadd.f32 %v497, %v696
  %v713 = vadd.f32 %v498, %v697
  %v714 = vadd.f32 %v499, %v698
  %v715 = vadd.f32 %v500, %v699
  %v716 = vadd.f32 %v501, %v700
  %v717 = vadd.f32 %v502, %v701
  %v718 = vadd.f32 %v503, %v702
  %v719 = vadd.f32 %v504, %v703
  %v720 = vadd.f32 %v505, %v704
  %v721 = vadd.f32 %v506, %v705
  %v722 = vadd.f32 %v507, %v706
  %v723 = vadd.f32 %v508, %v707
  %v724 = vadd.f32 %v509, %v708
  %725 = vst.msk [vmem:[%s3] sm:$0xff] %vm61, %v709
  %726 = vst.msk [vmem:[%s3 + $0x8] sm:$0xff] %vm61, %v710
  %727 = vst.msk [vmem:[%s3 + $0x10] sm:$0xff] %vm61, %v711
  %728 = vst.msk [vmem:[%s3 + $0x18] sm:$0xff] %vm61, %v712
  %729 = vst.msk [vmem:[%s3 + $0x20] sm:$0xff] %vm61, %v713
  %730 = vst.msk [vmem:[%s3 + $0x28] sm:$0xff] %vm61, %v714
  %731 = vst.msk [vmem:[%s3 + $0x30] sm:$0xff] %vm61, %v715
  %732 = vst.msk [vmem:[%s3 + $0x38] sm:$0xff] %vm61, %v716
  %733 = vst.msk [vmem:[%s3 + $0x40] sm:$0xff] %vm61, %v717
  %734 = vst.msk [vmem:[%s3 + $0x48] sm:$0xff] %vm61, %v718
  %735 = vst.msk [vmem:[%s3 + $0x50] sm:$0xff] %vm61, %v719
  %736 = vst.msk [vmem:[%s3 + $0x58] sm:$0xff] %vm61, %v720
  %737 = vst.msk [vmem:[%s3 + $0x60] sm:$0xff] %vm61, %v721
  %738 = vst.msk [vmem:[%s3 + $0x68] sm:$0xff] %vm61, %v722
  %739 = vst.msk [vmem:[%s3 + $0x70] sm:$0xff] %vm61, %v723
  %740 = vst.msk [vmem:[%s3 + $0x78] sm:$0xff] %vm61, %v724
  // Predicated region
  $region14: #{gnn_conv_forward.9} parent=0 // pred_check
    _
  $region15: #{gnn_conv_forward.9} parent=0 // pred_check_branch
    %742 = sbr.rel (0) target = $region17
  $region16: #{gnn_conv_forward.9} parent=0 // pred_region
    _
  $region17: #{gnn_conv_forward.9} parent=0 // pred_fallthru
    _
  // Predicated region
  $region18: #{gnn_conv_forward.9} parent=0 // pred_check
    _
  $region19: #{gnn_conv_forward.9} parent=0 // pred_check_branch
    %744 = sbr.rel (0) target = $region21
  $region20: #{gnn_conv_forward.9} parent=0 // pred_region
    _
  $region21: #{gnn_conv_forward.9} parent=0 // pred_fallthru
    _

// kernel: gnn_conv_forward.10
$region0: #{gnn_conv_forward.10}
  #allocation0 [shape = 'u32[]', space=smem, size = 0x4, offset = 0x4, fixed_abs, tag = 'smem constant byte address 0x4 - core index']
  #allocation1 [shape = 'u32[72,128]{1,0:T(1,128)}', space=vmem, size = 0x9000, scoped, tag = 'internal scratch']
  #allocation2 [shape = 'f32[64,96]{1,0:T(8,128)}', space=vmem, size = 0x8000, scoped, tag = 'scratch operand']
  %s0 = inlined_call_operand.vmem [shape: f32[64,32], index: 0, kind: input, shape index: {}]
  %s1 = inlined_call_operand.vmem [shape: s32[1,128], index: 1, kind: input, shape index: {}]
  %s2 = inlined_call_operand.vmem [shape: bf16[128,96], index: 2, kind: input, shape index: {}]
  %s3 = inlined_call_operand.vmem [shape: f32[32,32], index: 3, kind: input, shape index: {}]
  %s4 = inlined_call_operand.vmem [shape: f32[1,32], index: 4, kind: input, shape index: {}]
  %s5 = inlined_call_operand.vmem [shape: f32[1,32], index: 5, kind: input, shape index: {}]
  %s6 = inlined_call_operand.vmem [shape: f32[1,32], index: 6, kind: input, shape index: {}]
  %s7 = inlined_call_operand.vmem [shape: f32[64,32], index: 7, kind: output, shape index: {}]
  %s8 = sld [smem:[#allocation0]]
  $region46: #{gnn_conv_forward.10} parent=0
    _
  %s10 = ssub.s32 1, %s8
  %s11 = scalar_select 0, %s10, %s8
  // Predicated region
  $region2: #{gnn_conv_forward.10} parent=0 // pred_check
    _
  $region3: #{gnn_conv_forward.10} parent=0 // pred_check_branch
    %13 = sbr.rel (0) target = $region5
  $region4: #{gnn_conv_forward.10} parent=0 // pred_region
    _
  $region5: #{gnn_conv_forward.10} parent=0 // pred_fallthru
    _
  // Predicated region
  $region6: #{gnn_conv_forward.10} parent=0 // pred_check
    _
  $region7: #{gnn_conv_forward.10} parent=0 // pred_check_branch
    %15 = sbr.rel (0) target = $region9
  $region8: #{gnn_conv_forward.10} parent=0 // pred_region
    _
  $region9: #{gnn_conv_forward.10} parent=0 // pred_fallthru
    _
  // Predicated region
  $region10: #{gnn_conv_forward.10} parent=0 // pred_check
    _
  $region11: #{gnn_conv_forward.10} parent=0 // pred_check_branch
    %17 = sbr.rel (0) target = $region13
  $region12: #{gnn_conv_forward.10} parent=0 // pred_region
    _
  $region13: #{gnn_conv_forward.10} parent=0 // pred_fallthru
    _
  // Predicated region
  $region14: #{gnn_conv_forward.10} parent=0 // pred_check
    _
  $region15: #{gnn_conv_forward.10} parent=0 // pred_check_branch
    %19 = sbr.rel (0) target = $region17
  $region16: #{gnn_conv_forward.10} parent=0 // pred_region
    _
  $region17: #{gnn_conv_forward.10} parent=0 // pred_fallthru
    _
  // Predicated region
  $region18: #{gnn_conv_forward.10} parent=0 // pred_check
    _
  $region19: #{gnn_conv_forward.10} parent=0 // pred_check_branch
    %21 = sbr.rel (0) target = $region21
  $region20: #{gnn_conv_forward.10} parent=0 // pred_region
    _
  $region21: #{gnn_conv_forward.10} parent=0 // pred_fallthru
    _
  // Predicated region
  $region22: #{gnn_conv_forward.10} parent=0 // pred_check
    _
  $region23: #{gnn_conv_forward.10} parent=0 // pred_check_branch
    %23 = sbr.rel (0) target = $region25
  $region24: #{gnn_conv_forward.10} parent=0 // pred_region
    _
  $region25: #{gnn_conv_forward.10} parent=0 // pred_fallthru
    _
  // Predicated region
  $region26: #{gnn_conv_forward.10} parent=0 // pred_check
    _
  $region27: #{gnn_conv_forward.10} parent=0 // pred_check_branch
    %25 = sbr.rel (0) target = $region29
  $region28: #{gnn_conv_forward.10} parent=0 // pred_region
    _
  $region29: #{gnn_conv_forward.10} parent=0 // pred_fallthru
    _
  %p27 = scmp.eq.s32.totalorder 0, 0
  // Predicated region
  $region30: #{gnn_conv_forward.10} parent=0 // pred_check
    %p28 = pneg %p27
  $region31: #{gnn_conv_forward.10} parent=0 // pred_check_branch
    %30 = sbr.rel (%p28) target = $region33
  $region32: #{gnn_conv_forward.10} parent=0 // pred_region
    %vm31 = vcmask 785408
    %32 = vst.msk [vmem:[#allocation2] sm:$0xff] %vm31, 0.0
    %33 = vst.msk [vmem:[#allocation2 + $0x8] sm:$0xff] %vm31, 0.0
    %34 = vst.msk [vmem:[#allocation2 + $0x10] sm:$0xff] %vm31, 0.0
    %35 = vst.msk [vmem:[#allocation2 + $0x18] sm:$0xff] %vm31, 0.0
    %36 = vst.msk [vmem:[#allocation2 + $0x20] sm:$0xff] %vm31, 0.0
    %37 = vst.msk [vmem:[#allocation2 + $0x28] sm:$0xff] %vm31, 0.0
    %38 = vst.msk [vmem:[#allocation2 + $0x30] sm:$0xff] %vm31, 0.0
    %39 = vst.msk [vmem:[#allocation2 + $0x38] sm:$0xff] %vm31, 0.0
  $region33: #{gnn_conv_forward.10} parent=0 // pred_fallthru
    _
  %s40 = smul.u32 0, 64
  %v41 = vlaneseq
  %v42 = vshrl.u32 %v41, 7
  %v43 = vadd.s32 %v42, 8
  %v44 = vadd.s32 %v42, 16
  %v45 = vadd.s32 %v42, 24
  %v46 = vadd.s32 %v42, 32
  %v47 = vadd.s32 %v42, 40
  %v48 = vadd.s32 %v42, 48
  %v49 = vadd.s32 %v42, 56
  %v50 = vstv %s40
  %v51 = vadd.s32 %v50, %v42
  %v52 = vadd.s32 %v50, %v43
  %v53 = vadd.s32 %v50, %v44
  %v54 = vadd.s32 %v50, %v45
  %v55 = vadd.s32 %v50, %v46
  %v56 = vadd.s32 %v50, %v47
  %v57 = vadd.s32 %v50, %v48
  %v58 = vadd.s32 %v50, %v49
  %v59 = vld [vmem:[%s1] sm:$0x1]
  %v60 = vperm.slane %v59, 0
  %vm61 = vcmp.eq.s32.totalorder %v51, %v60
  %vm62 = vcmp.eq.s32.totalorder %v52, %v60
  %vm63 = vcmp.eq.s32.totalorder %v53, %v60
  %vm64 = vcmp.eq.s32.totalorder %v54, %v60
  %vm65 = vcmp.eq.s32.totalorder %v55, %v60
  %vm66 = vcmp.eq.s32.totalorder %v56, %v60
  %vm67 = vcmp.eq.s32.totalorder %v57, %v60
  %vm68 = vcmp.eq.s32.totalorder %v58, %v60
  %v69 = vsel %vm61, 1, 0
  %v70 = vsel %vm62, 1, 0
  %v71 = vsel %vm63, 1, 0
  %v72 = vsel %vm64, 1, 0
  %v73 = vsel %vm65, 1, 0
  %v74 = vsel %vm66, 1, 0
  %v75 = vsel %vm67, 1, 0
  %v76 = vsel %vm68, 1, 0
  %v77 = vcvt.s32.f32 %v69
  %v78 = vcvt.s32.f32 %v70
  %v79 = vcvt.s32.f32 %v71
  %v80 = vcvt.s32.f32 %v72
  %v81 = vcvt.s32.f32 %v73
  %v82 = vcvt.s32.f32 %v74
  %v83 = vcvt.s32.f32 %v75
  %v84 = vcvt.s32.f32 %v76
  %v85 = vpack.c.bf16 %v78, %v77
  %v86 = vpack.c.bf16 %v80, %v79
  %v87 = vpack.c.bf16 %v82, %v81
  %v88 = vpack.c.bf16 %v84, %v83
  %v89 = vld [vmem:[#allocation2] sm:$0xff]
  %v90 = vld [vmem:[#allocation2 + $0x8] sm:$0xff]
  %v91 = vld [vmem:[#allocation2 + $0x10] sm:$0xff]
  %v92 = vld [vmem:[#allocation2 + $0x18] sm:$0xff]
  %v93 = vld [vmem:[#allocation2 + $0x20] sm:$0xff]
  %v94 = vld [vmem:[#allocation2 + $0x28] sm:$0xff]
  %v95 = vld [vmem:[#allocation2 + $0x30] sm:$0xff]
  %v96 = vld [vmem:[#allocation2 + $0x38] sm:$0xff]
  %v97 = vld [vmem:[%s2] sm:$0xf]
  %v98 = vld [vmem:[%s2 + $0x4] sm:$0xf]
  %v99 = vld [vmem:[%s2 + $0x8] sm:$0xf]
  %v100 = vld [vmem:[%s2 + $0xc] sm:$0xf]
  %v101 = vld [vmem:[%s2 + $0x10] sm:$0xf]
  %v102 = vld [vmem:[%s2 + $0x14] sm:$0xf]
  %v103 = vld [vmem:[%s2 + $0x18] sm:$0xf]
  %v104 = vld [vmem:[%s2 + $0x1c] sm:$0xf]
  %v105 = vld [vmem:[%s2 + $0x20] sm:$0xf]
  %v106 = vld [vmem:[%s2 + $0x24] sm:$0xf]
  %v107 = vld [vmem:[%s2 + $0x28] sm:$0xf]
  %v108 = vld [vmem:[%s2 + $0x2c] sm:$0xf]
  %v109 = vld [vmem:[%s2 + $0x30] sm:$0xf]
  %v110 = vld [vmem:[%s2 + $0x34] sm:$0xf]
  %v111 = vld [vmem:[%s2 + $0x38] sm:$0xf]
  %v112 = vld [vmem:[%s2 + $0x3c] sm:$0xf]
  %v129 = vunpack.c.l.b16 %v97
  %v130 = vunpack.c.l.b16 %v98
  %v131 = vunpack.c.l.b16 %v99
  %v132 = vunpack.c.l.b16 %v100
  %v133 = vunpack.c.l.b16 %v101
  %v134 = vunpack.c.l.b16 %v102
  %v135 = vunpack.c.l.b16 %v103
  %v136 = vunpack.c.l.b16 %v104
  %v137 = vunpack.c.l.b16 %v105
  %v138 = vunpack.c.l.b16 %v106
  %v139 = vunpack.c.l.b16 %v107
  %v140 = vunpack.c.l.b16 %v108
  %v141 = vunpack.c.l.b16 %v109
  %v142 = vunpack.c.l.b16 %v110
  %v143 = vunpack.c.l.b16 %v111
  %v144 = vunpack.c.l.b16 %v112
  %v145 = vpack.c.b16 %v130, %v129
  %v146 = vpack.c.b16 %v132, %v131
  %v147 = vpack.c.b16 %v134, %v133
  %v148 = vpack.c.b16 %v136, %v135
  %v149 = vpack.c.b16 %v138, %v137
  %v150 = vpack.c.b16 %v140, %v139
  %v151 = vpack.c.b16 %v142, %v141
  %v152 = vpack.c.b16 %v144, %v143
  %161 = vmatpush.bf16.msra.mxu0 %v152
  %162 = vmatpush.bf16.msra.mxu0 %v151
  %163 = vmatpush.bf16.msra.mxu0 %v150
  %164 = vmatpush.bf16.msra.mxu0 %v149
  %165 = vmatpush.bf16.msra.mxu0 %v148
  %166 = vmatpush.bf16.msra.mxu0 %v147
  %167 = vmatpush.bf16.msra.mxu0 %v146
  %168 = vmatpush.bf16.msra.mxu0 %v145
  %169 = vmatmul.bf16.gmra.mxu0 %v85
  %v170 = vpop.f32.mrf.mxu0
  %v171 = vadd.f32 0.0, %v170
  %v172 = vpop.f32.mrf.mxu0
  %v173 = vadd.f32 0.0, %v172
  %174 = vmatmul.bf16.gmra.mxu0 %v86
  %v175 = vpop.f32.mrf.mxu0
  %v176 = vadd.f32 0.0, %v175
  %v177 = vpop.f32.mrf.mxu0
  %v178 = vadd.f32 0.0, %v177
  %179 = vmatmul.bf16.gmra.mxu0 %v87
  %v180 = vpop.f32.mrf.mxu0
  %v181 = vadd.f32 0.0, %v180
  %v182 = vpop.f32.mrf.mxu0
  %v183 = vadd.f32 0.0, %v182
  %184 = vmatmul.bf16.gmra.mxu0 %v88
  %v185 = vpop.f32.mrf.mxu0
  %v186 = vadd.f32 0.0, %v185
  %v187 = vpop.f32.mrf.mxu0
  %v188 = vadd.f32 0.0, %v187
  %189 = vdwg.mxu0
  %v190 = vadd.f32 %v89, %v171
  %v191 = vadd.f32 %v90, %v173
  %v192 = vadd.f32 %v91, %v176
  %v193 = vadd.f32 %v92, %v178
  %v194 = vadd.f32 %v93, %v181
  %v195 = vadd.f32 %v94, %v183
  %v196 = vadd.f32 %v95, %v186
  %v197 = vadd.f32 %v96, %v188
  %vm198 = vcmask 785408
  %199 = vst.msk [vmem:[#allocation2] sm:$0xff] %vm198, %v190
  %200 = vst.msk [vmem:[#allocation2 + $0x8] sm:$0xff] %vm198, %v191
  %201 = vst.msk [vmem:[#allocation2 + $0x10] sm:$0xff] %vm198, %v192
  %202 = vst.msk [vmem:[#allocation2 + $0x18] sm:$0xff] %vm198, %v193
  %203 = vst.msk [vmem:[#allocation2 + $0x20] sm:$0xff] %vm198, %v194
  %204 = vst.msk [vmem:[#allocation2 + $0x28] sm:$0xff] %vm198, %v195
  %205 = vst.msk [vmem:[#allocation2 + $0x30] sm:$0xff] %vm198, %v196
  %206 = vst.msk [vmem:[#allocation2 + $0x38] sm:$0xff] %vm198, %v197
  // Predicated region
  $region34: #{gnn_conv_forward.10} parent=0 // pred_check
    %p207 = pneg %p27
  $region35: #{gnn_conv_forward.10} parent=0 // pred_check_branch
    %209 = sbr.rel (%p207) target = $region37
  $region36: #{gnn_conv_forward.10} parent=0 // pred_region
    %v210 = vld [vmem:[#allocation2] sm:$0xff]
    %v211 = vld [vmem:[#allocation2 + $0x8] sm:$0xff]
    %v212 = vld [vmem:[#allocation2 + $0x10] sm:$0xff]
    %v213 = vld [vmem:[#allocation2 + $0x18] sm:$0xff]
    %v214 = vld [vmem:[#allocation2 + $0x20] sm:$0xff]
    %v215 = vld [vmem:[#allocation2 + $0x28] sm:$0xff]
    %v216 = vld [vmem:[#allocation2 + $0x30] sm:$0xff]
    %v217 = vld [vmem:[#allocation2 + $0x38] sm:$0xff]
    %v218 = vld [vmem:[%s0] sm:$0xff]
    %v219 = vld [vmem:[%s0 + $0x8] sm:$0xff]
    %v220 = vld [vmem:[%s0 + $0x10] sm:$0xff]
    %v221 = vld [vmem:[%s0 + $0x18] sm:$0xff]
    %v222 = vld [vmem:[%s0 + $0x20] sm:$0xff]
    %v223 = vld [vmem:[%s0 + $0x28] sm:$0xff]
    %v224 = vld [vmem:[%s0 + $0x30] sm:$0xff]
    %v225 = vld [vmem:[%s0 + $0x38] sm:$0xff]
    %v226 = vadd.f32 %v218, %v210
    %v227 = vadd.f32 %v219, %v211
    %v228 = vadd.f32 %v220, %v212
    %v229 = vadd.f32 %v221, %v213
    %v230 = vadd.f32 %v222, %v214
    %v231 = vadd.f32 %v223, %v215
    %v232 = vadd.f32 %v224, %v216
    %v233 = vadd.f32 %v225, %v217
    %v234 = vmax.f32 %v210, 1.0
    %v235 = vmax.f32 %v211, 1.0
    %v236 = vmax.f32 %v212, 1.0
    %v237 = vmax.f32 %v213, 1.0
    %v238 = vmax.f32 %v214, 1.0
    %v239 = vmax.f32 %v215, 1.0
    %v240 = vmax.f32 %v216, 1.0
    %v241 = vmax.f32 %v217, 1.0
    %v242 = vrcp.pop %v234
    %v243 = vrcp.pop %v235
    %v244 = vrcp.pop %v236
    %v245 = vrcp.pop %v237
    %v246 = vrcp.pop %v238
    %v247 = vrcp.pop %v239
    %v248 = vrcp.pop %v240
    %v249 = vrcp.pop %v241
    %vm250 = vcmp.gt.f32.partialorder %v210, 0.0
    %vm251 = vcmp.gt.f32.partialorder %v211, 0.0
    %vm252 = vcmp.gt.f32.partialorder %v212, 0.0
    %vm253 = vcmp.gt.f32.partialorder %v213, 0.0
    %vm254 = vcmp.gt.f32.partialorder %v214, 0.0
    %vm255 = vcmp.gt.f32.partialorder %v215, 0.0
    %vm256 = vcmp.gt.f32.partialorder %v216, 0.0
    %vm257 = vcmp.gt.f32.partialorder %v217, 0.0
    %266 = vrot.lane.b32.xlu0 %v242, 96
    %v267 = vpop.permute.xlu0 %266
    %268 = vrot.lane.b32.xlu0 %v243, 96
    %v269 = vpop.permute.xlu0 %268
    %270 = vrot.lane.b32.xlu0 %v244, 96
    %v271 = vpop.permute.xlu0 %270
    %272 = vrot.lane.b32.xlu0 %v245, 96
    %v273 = vpop.permute.xlu0 %272
    %274 = vrot.lane.b32.xlu0 %v246, 96
    %v275 = vpop.permute.xlu0 %274
    %276 = vrot.lane.b32.xlu0 %v247, 96
    %v277 = vpop.permute.xlu0 %276
    %278 = vrot.lane.b32.xlu0 %v248, 96
    %v279 = vpop.permute.xlu0 %278
    %280 = vrot.lane.b32.xlu0 %v249, 96
    %v281 = vpop.permute.xlu0 %280
    %v290 = vmul.f32 %v210, %v267
    %v291 = vmul.f32 %v211, %v269
    %v292 = vmul.f32 %v212, %v271
    %v293 = vmul.f32 %v213, %v273
    %v294 = vmul.f32 %v214, %v275
    %v295 = vmul.f32 %v215, %v277
    %v296 = vmul.f32 %v216, %v279
    %v297 = vmul.f32 %v217, %v281
    %306 = vrot.lane.b32.xlu0 %v290, 32
    %v307 = vpop.permute.xlu0 %306
    %308 = vrot.lane.b32.xlu0 %v291, 32
    %v309 = vpop.permute.xlu0 %308
    %310 = vrot.lane.b32.xlu0 %v292, 32
    %v311 = vpop.permute.xlu0 %310
    %312 = vrot.lane.b32.xlu0 %v293, 32
    %v313 = vpop.permute.xlu0 %312
    %314 = vrot.lane.b32.xlu0 %v294, 32
    %v315 = vpop.permute.xlu0 %314
    %316 = vrot.lane.b32.xlu0 %v295, 32
    %v317 = vpop.permute.xlu0 %316
    %318 = vrot.lane.b32.xlu0 %v296, 32
    %v319 = vpop.permute.xlu0 %318
    %320 = vrot.lane.b32.xlu0 %v297, 32
    %v321 = vpop.permute.xlu0 %320
    %v330 = vsel %vm250, %v307, 0.0
    %v331 = vsel %vm251, %v309, 0.0
    %v332 = vsel %vm252, %v311, 0.0
    %v333 = vsel %vm253, %v313, 0.0
    %v334 = vsel %vm254, %v315, 0.0
    %v335 = vsel %vm255, %v317, 0.0
    %v336 = vsel %vm256, %v319, 0.0
    %v337 = vsel %vm257, %v321, 0.0
    %v338 = vmax.f32 %v330, 0.0
    %v339 = vmax.f32 %v331, 0.0
    %v340 = vmax.f32 %v332, 0.0
    %v341 = vmax.f32 %v333, 0.0
    %v342 = vmax.f32 %v334, 0.0
    %v343 = vmax.f32 %v335, 0.0
    %v344 = vmax.f32 %v336, 0.0
    %v345 = vmax.f32 %v337, 0.0
    %v346 = vmul.f32 %v338, 0.1
    %v347 = vmul.f32 %v339, 0.1
    %v348 = vmul.f32 %v340, 0.1
    %v349 = vmul.f32 %v341, 0.1
    %v350 = vmul.f32 %v342, 0.1
    %v351 = vmul.f32 %v343, 0.1
    %v352 = vmul.f32 %v344, 0.1
    %v353 = vmul.f32 %v345, 0.1
    %362 = vrot.lane.b32.xlu0 %v346, 64
    %v363 = vpop.permute.xlu0 %362
    %364 = vrot.lane.b32.xlu0 %v347, 64
    %v365 = vpop.permute.xlu0 %364
    %366 = vrot.lane.b32.xlu0 %v348, 64
    %v367 = vpop.permute.xlu0 %366
    %368 = vrot.lane.b32.xlu0 %v349, 64
    %v369 = vpop.permute.xlu0 %368
    %370 = vrot.lane.b32.xlu0 %v350, 64
    %v371 = vpop.permute.xlu0 %370
    %372 = vrot.lane.b32.xlu0 %v351, 64
    %v373 = vpop.permute.xlu0 %372
    %374 = vrot.lane.b32.xlu0 %v352, 64
    %v375 = vpop.permute.xlu0 %374
    %376 = vrot.lane.b32.xlu0 %v353, 64
    %v377 = vpop.permute.xlu0 %376
    %v386 = vadd.f32 %v226, %v363
    %v387 = vadd.f32 %v227, %v365
    %v388 = vadd.f32 %v228, %v367
    %v389 = vadd.f32 %v229, %v369
    %v390 = vadd.f32 %v230, %v371
    %v391 = vadd.f32 %v231, %v373
    %v392 = vadd.f32 %v232, %v375
    %v393 = vadd.f32 %v233, %v377
    %v394 = vpack.c.bf16 %v387, %v386
    %v395 = vpack.c.bf16 %v389, %v388
    %v396 = vpack.c.bf16 %v391, %v390
    %v397 = vpack.c.bf16 %v393, %v392
    %v398 = vld [vmem:[%s3] sm:$0xff]
    %v399 = vld [vmem:[%s3 + $0x8] sm:$0xff]
    %v400 = vld [vmem:[%s3 + $0x10] sm:$0xff]
    %v401 = vld [vmem:[%s3 + $0x18] sm:$0xff]
    %v402 = vpack.c.bf16 %v399, %v398
    %v403 = vpack.c.bf16 %v401, %v400
    %v404 = vld [vmem:[%s4] sm:$0x1]
    %v406 = vperm.slane %v404, 0
    %vm408 = vcmask 261120
    %v410 = vsel %vm408, %v394, 0
    %v413 = vsel %vm408, %v395, 0
    %v416 = vsel %vm408, %v396, 0
    %v419 = vsel %vm408, %v397, 0
    %421 = vmatpush.bf16.msra.mxu0 0
    %422 = vmatpush.bf16.msra.mxu0 0
    %423 = vmatpush.bf16.msra.mxu0 0
    %424 = vmatpush.bf16.msra.mxu0 0
    %425 = vmatpush.bf16.msra.mxu0 0
    %426 = vmatpush.bf16.msra.mxu0 0
    %427 = vmatpush.bf16.msra.mxu0 %v403
    %428 = vmatpush.bf16.msra.mxu0 %v402
    %429 = vmatmul.bf16.gmra.mxu0 %v410
    %v430 = vpop.f32.mrf.mxu0
    %v431 = vadd.f32 %v406, %v430
    %v432 = vpop.f32.mrf.mxu0
    %v433 = vadd.f32 %v406, %v432
    %434 = vmatmul.bf16.gmra.mxu0 %v413
    %v435 = vpop.f32.mrf.mxu0
    %v436 = vadd.f32 %v406, %v435
    %v437 = vpop.f32.mrf.mxu0
    %v438 = vadd.f32 %v406, %v437
    %439 = vmatmul.bf16.gmra.mxu0 %v416
    %v440 = vpop.f32.mrf.mxu0
    %v441 = vadd.f32 %v406, %v440
    %v442 = vpop.f32.mrf.mxu0
    %v443 = vadd.f32 %v406, %v442
    %444 = vmatmul.bf16.gmra.mxu0 %v419
    %v445 = vpop.f32.mrf.mxu0
    %v446 = vadd.f32 %v406, %v445
    %v447 = vpop.f32.mrf.mxu0
    %v448 = vadd.f32 %v406, %v447
    %449 = vdwg.mxu0
    %v450 = vsel %vm408, %v431, 0.0
    %451 = vadd.xlane.f32.xlu0 %v450
    %v452 = vpop.xlane.xlu0 %451
    %v453 = vsel %vm408, %v433, 0.0
    %454 = vadd.xlane.f32.xlu0 %v453
    %v455 = vpop.xlane.xlu0 %454
    %v456 = vsel %vm408, %v436, 0.0
    %457 = vadd.xlane.f32.xlu0 %v456
    %v458 = vpop.xlane.xlu0 %457
    %v459 = vsel %vm408, %v438, 0.0
    %460 = vadd.xlane.f32.xlu0 %v459
    %v461 = vpop.xlane.xlu0 %460
    %v462 = vsel %vm408, %v441, 0.0
    %463 = vadd.xlane.f32.xlu0 %v462
    %v464 = vpop.xlane.xlu0 %463
    %v465 = vsel %vm408, %v443, 0.0
    %466 = vadd.xlane.f32.xlu0 %v465
    %v467 = vpop.xlane.xlu0 %466
    %v468 = vsel %vm408, %v446, 0.0
    %469 = vadd.xlane.f32.xlu0 %v468
    %v470 = vpop.xlane.xlu0 %469
    %v471 = vsel %vm408, %v448, 0.0
    %472 = vadd.xlane.f32.xlu0 %v471
    %v473 = vpop.xlane.xlu0 %472
    %v474 = vrcp.pop 32.0
    %v475 = vmul.f32 32.0, %v474
    %v476 = vsub.f32 1.0, %v475
    %v477 = vmul.f32 %v474, %v476
    %v478 = vadd.f32 %v474, %v477
    %vm479 = vweird.f32 %v474
    %v480 = vsel %vm479, %v474, %v478
    %v481 = vmul.f32 %v452, %v480
    %v482 = vmul.f32 %v455, %v480
    %v483 = vmul.f32 %v458, %v480
    %v484 = vmul.f32 %v461, %v480
    %v485 = vmul.f32 %v464, %v480
    %v486 = vmul.f32 %v467, %v480
    %v487 = vmul.f32 %v470, %v480
    %v488 = vmul.f32 %v473, %v480
    %v489 = vsub.f32 %v431, %v481
    %v490 = vsub.f32 %v433, %v482
    %v491 = vsub.f32 %v436, %v483
    %v492 = vsub.f32 %v438, %v484
    %v493 = vsub.f32 %v441, %v485
    %v494 = vsub.f32 %v443, %v486
    %v495 = vsub.f32 %v446, %v487
    %v496 = vsub.f32 %v448, %v488
    %v497 = vmul.f32 %v489, %v489
    %v498 = vmul.f32 %v490, %v490
    %v499 = vmul.f32 %v491, %v491
    %v500 = vmul.f32 %v492, %v492
    %v501 = vmul.f32 %v493, %v493
    %v502 = vmul.f32 %v494, %v494
    %v503 = vmul.f32 %v495, %v495
    %v504 = vmul.f32 %v496, %v496
    %v505 = vsel %vm408, %v497, 0.0
    %506 = vadd.xlane.f32.xlu0 %v505
    %v507 = vpop.xlane.xlu0 %506
    %v508 = vsel %vm408, %v498, 0.0
    %509 = vadd.xlane.f32.xlu0 %v508
    %v510 = vpop.xlane.xlu0 %509
    %v511 = vsel %vm408, %v499, 0.0
    %512 = vadd.xlane.f32.xlu0 %v511
    %v513 = vpop.xlane.xlu0 %512
    %v514 = vsel %vm408, %v500, 0.0
    %515 = vadd.xlane.f32.xlu0 %v514
    %v516 = vpop.xlane.xlu0 %515
    %v517 = vsel %vm408, %v501, 0.0
    %518 = vadd.xlane.f32.xlu0 %v517
    %v519 = vpop.xlane.xlu0 %518
    %v520 = vsel %vm408, %v502, 0.0
    %521 = vadd.xlane.f32.xlu0 %v520
    %v522 = vpop.xlane.xlu0 %521
    %v523 = vsel %vm408, %v503, 0.0
    %524 = vadd.xlane.f32.xlu0 %v523
    %v525 = vpop.xlane.xlu0 %524
    %v526 = vsel %vm408, %v504, 0.0
    %527 = vadd.xlane.f32.xlu0 %v526
    %v528 = vpop.xlane.xlu0 %527
    %v529 = vmul.f32 %v507, %v480
    %v530 = vmul.f32 %v510, %v480
    %v531 = vmul.f32 %v513, %v480
    %v532 = vmul.f32 %v516, %v480
    %v533 = vmul.f32 %v519, %v480
    %v534 = vmul.f32 %v522, %v480
    %v535 = vmul.f32 %v525, %v480
    %v536 = vmul.f32 %v528, %v480
    %v537 = vadd.f32 %v529, 1e-05
    %v538 = vadd.f32 %v530, 1e-05
    %v539 = vadd.f32 %v531, 1e-05
    %v540 = vadd.f32 %v532, 1e-05
    %v541 = vadd.f32 %v533, 1e-05
    %v542 = vadd.f32 %v534, 1e-05
    %v543 = vadd.f32 %v535, 1e-05
    %v544 = vadd.f32 %v536, 1e-05
    %v545 = vrsqrt.pop %v537
    %v546 = vmul.f32 %v545, %v537
    %v547 = vmul.f32 %v546, %v545
    %v548 = vmul.f32 0.5, %v547
    %v549 = vsub.f32 1.5, %v548
    %v550 = vmul.f32 %v545, %v549
    %vm551 = vweird.f32 %v537
    %vm552 = vweird.f32 %v545
    %vm553 = vmor %vm551, %vm552
    %v554 = vsel %vm553, %v545, %v550
    %v555 = vrsqrt.pop %v538
    %v556 = vmul.f32 %v555, %v538
    %v557 = vmul.f32 %v556, %v555
    %v558 = vmul.f32 0.5, %v557
    %v559 = vsub.f32 1.5, %v558
    %v560 = vmul.f32 %v555, %v559
    %vm561 = vweird.f32 %v538
    %vm562 = vweird.f32 %v555
    %vm563 = vmor %vm561, %vm562
    %v564 = vsel %vm563, %v555, %v560
    %v565 = vrsqrt.pop %v539
    %v566 = vmul.f32 %v565, %v539
    %v567 = vmul.f32 %v566, %v565
    %v568 = vmul.f32 0.5, %v567
    %v569 = vsub.f32 1.5, %v568
    %v570 = vmul.f32 %v565, %v569
    %vm571 = vweird.f32 %v539
    %vm572 = vweird.f32 %v565
    %vm573 = vmor %vm571, %vm572
    %v574 = vsel %vm573, %v565, %v570
    %v575 = vrsqrt.pop %v540
    %v576 = vmul.f32 %v575, %v540
    %v577 = vmul.f32 %v576, %v575
    %v578 = vmul.f32 0.5, %v577
    %v579 = vsub.f32 1.5, %v578
    %v580 = vmul.f32 %v575, %v579
    %vm581 = vweird.f32 %v540
    %vm582 = vweird.f32 %v575
    %vm583 = vmor %vm581, %vm582
    %v584 = vsel %vm583, %v575, %v580
    %v585 = vrsqrt.pop %v541
    %v586 = vmul.f32 %v585, %v541
    %v587 = vmul.f32 %v586, %v585
    %v588 = vmul.f32 0.5, %v587
    %v589 = vsub.f32 1.5, %v588
    %v590 = vmul.f32 %v585, %v589
    %vm591 = vweird.f32 %v541
    %vm592 = vweird.f32 %v585
    %vm593 = vmor %vm591, %vm592
    %v594 = vsel %vm593, %v585, %v590
    %v595 = vrsqrt.pop %v542
    %v596 = vmul.f32 %v595, %v542
    %v597 = vmul.f32 %v596, %v595
    %v598 = vmul.f32 0.5, %v597
    %v599 = vsub.f32 1.5, %v598
    %v600 = vmul.f32 %v595, %v599
    %vm601 = vweird.f32 %v542
    %vm602 = vweird.f32 %v595
    %vm603 = vmor %vm601, %vm602
    %v604 = vsel %vm603, %v595, %v600
    %v605 = vrsqrt.pop %v543
    %v606 = vmul.f32 %v605, %v543
    %v607 = vmul.f32 %v606, %v605
    %v608 = vmul.f32 0.5, %v607
    %v609 = vsub.f32 1.5, %v608
    %v610 = vmul.f32 %v605, %v609
    %vm611 = vweird.f32 %v543
    %vm612 = vweird.f32 %v605
    %vm613 = vmor %vm611, %vm612
    %v614 = vsel %vm613, %v605, %v610
    %v615 = vrsqrt.pop %v544
    %v616 = vmul.f32 %v615, %v544
    %v617 = vmul.f32 %v616, %v615
    %v618 = vmul.f32 0.5, %v617
    %v619 = vsub.f32 1.5, %v618
    %v620 = vmul.f32 %v615, %v619
    %vm621 = vweird.f32 %v544
    %vm622 = vweird.f32 %v615
    %vm623 = vmor %vm621, %vm622
    %v624 = vsel %vm623, %v615, %v620
    %v625 = vmul.f32 %v489, %v554
    %v626 = vmul.f32 %v490, %v564
    %v627 = vmul.f32 %v491, %v574
    %v628 = vmul.f32 %v492, %v584
    %v629 = vmul.f32 %v493, %v594
    %v630 = vmul.f32 %v494, %v604
    %v631 = vmul.f32 %v495, %v614
    %v632 = vmul.f32 %v496, %v624
    %v633 = vld [vmem:[%s5] sm:$0x1]
    %v635 = vperm.slane %v633, 0
    %v637 = vmul.f32 %v625, %v635
    %v638 = vmul.f32 %v626, %v635
    %v639 = vmul.f32 %v627, %v635
    %v640 = vmul.f32 %v628, %v635
    %v641 = vmul.f32 %v629, %v635
    %v642 = vmul.f32 %v630, %v635
    %v643 = vmul.f32 %v631, %v635
    %v644 = vmul.f32 %v632, %v635
    %v645 = vld [vmem:[%s6] sm:$0x1]
    %v647 = vperm.slane %v645, 0
    %v649 = vadd.f32 %v637, %v647
    %v650 = vadd.f32 %v638, %v647
    %v651 = vadd.f32 %v639, %v647
    %v652 = vadd.f32 %v640, %v647
    %v653 = vadd.f32 %v641, %v647
    %v654 = vadd.f32 %v642, %v647
    %v655 = vadd.f32 %v643, %v647
    %v656 = vadd.f32 %v644, %v647
    %657 = vst.msk [vmem:[%s7] sm:$0xff] %vm408, %v649
    %658 = vst.msk [vmem:[%s7 + $0x8] sm:$0xff] %vm408, %v650
    %659 = vst.msk [vmem:[%s7 + $0x10] sm:$0xff] %vm408, %v651
    %660 = vst.msk [vmem:[%s7 + $0x18] sm:$0xff] %vm408, %v652
    %661 = vst.msk [vmem:[%s7 + $0x20] sm:$0xff] %vm408, %v653
    %662 = vst.msk [vmem:[%s7 + $0x28] sm:$0xff] %vm408, %v654
    %663 = vst.msk [vmem:[%s7 + $0x30] sm:$0xff] %vm408, %v655
    %664 = vst.msk [vmem:[%s7 + $0x38] sm:$0xff] %vm408, %v656
  $region37: #{gnn_conv_forward.10} parent=0 // pred_fallthru
    _
  // Predicated region
  $region38: #{gnn_conv_forward.10} parent=0 // pred_check
    _
  $region39: #{gnn_conv_forward.10} parent=0 // pred_check_branch
    %666 = sbr.rel (0) target = $region41
  $region40: #{gnn_conv_forward.10} parent=0 // pred_region
    _
  $region41: #{gnn_conv_forward.10} parent=0 // pred_fallthru
    _
  // Predicated region
  $region42: #{gnn_conv_forward.10} parent=0 // pred_check
    _
  $region43: #{gnn_conv_forward.10} parent=0 // pred_check_branch
    %668 = sbr.rel (0) target = $region45
  $region44: #{gnn_conv_forward.10} parent=0 // pred_region
    _
  $region45: #{gnn_conv_forward.10} parent=0 // pred_fallthru
    _

</llo_original>
